<compile_context>
chip_gen: v7x
topology: tpu7x:2x2x1
jax: 0.10.0
libtpu: 0.0.40
codegen_flags: <defaults>
</compile_context>

<pallas_src>
import functools

import jax
import jax.numpy as jnp
from jax.experimental import pallas as pl
from jax.experimental.pallas import tpu as pltpu


def _layernorm_f32(v, gamma, beta, eps):
    # v: (N, D) f32, gamma/beta: (1, D) f32
    mean = jnp.mean(v, axis=-1, keepdims=True)
    c = v - mean
    var = jnp.mean(c * c, axis=-1, keepdims=True)
    return c * jax.lax.rsqrt(var + eps) * gamma + beta


def _encoder_block_kernel(
    x_ref,
    wq_ref, bq_ref, wk_ref, bk_ref, wv_ref, bv_ref, wo_ref, bo_ref,
    g1_ref, be1_ref,
    w1_ref, b1_ref, w2_ref, b2_ref,
    g2_ref, be2_ref,
    o_ref,
    *, num_heads, head_dim, scale, eps,
):
    f32 = jnp.float32
    bf16 = jnp.bfloat16
    bt, s, d = x_ref.shape          # (batch_tile, seq, embed)
    n = bt * s

    # Residual / normalization path in f32; MXU operands in bf16.
    x = x_ref[...].astype(f32).reshape(n, d)        # merge leading dims only
    xb = x.astype(bf16)

    # ---- QKV projections: bf16 MXU operands, f32 accumulation ----
    q = jnp.dot(xb, wq_ref[...], preferred_element_type=f32) + bq_ref[...]
    k = jnp.dot(xb, wk_ref[...], preferred_element_type=f32) + bk_ref[...]
    v = jnp.dot(xb, wv_ref[...], preferred_element_type=f32) + bv_ref[...]

    # Pre-scale q once (N*D multiplies) instead of scaling every score tile.
    q = q * scale

    # ---- split heads ----
    # One static lane-slice per head, stacked on a new leading (head) axis;
    # all reshapes here only merge/split *leading* dims, never the minormost
    # two, so they lower without lane relayouts.
    def split_heads(t):  # (N, D) f32 -> (H*Bt, S, hd) bf16
        parts = [
            t[:, h * head_dim:(h + 1) * head_dim].reshape(bt, s, head_dim)
            for h in range(num_heads)
        ]
        return jnp.stack(parts, axis=0).reshape(
            num_heads * bt, s, head_dim).astype(bf16)

    qh = split_heads(q)
    kh = split_heads(k)
    vh = split_heads(v)

    # ---- attention, batched over (head, batch-row) ----
    scores = jnp.einsum("bqd,bkd->bqk", qh, kh, preferred_element_type=f32)
    m = jnp.max(scores, axis=-1, keepdims=True)
    p = jnp.exp(scores - m)
    denom = jnp.sum(p, axis=-1, keepdims=True)
    attn = p * pl.reciprocal(denom, approx=True)      # EUP slot, ~free
    ctx = jnp.einsum("bqk,bkd->bqd", attn.astype(bf16), vh,
                     preferred_element_type=f32)       # (H*Bt, S, hd) f32

    # ---- merge heads, then ONE long-contraction output projection ----
    ctx = ctx.reshape(num_heads, bt, s, head_dim)       # split leading dim
    ctx = jnp.concatenate(
        [ctx[h] for h in range(num_heads)], axis=-1)    # (Bt, S, D)
    ctx = ctx.reshape(n, d)                             # merge leading dims
    attn_out = jnp.dot(ctx.astype(bf16), wo_ref[...],
                       preferred_element_type=f32) + bo_ref[...]

    # ---- residual + LayerNorm1 (f32, never leaves VMEM) ----
    x1 = _layernorm_f32(attn_out + x, g1_ref[...], be1_ref[...], eps)

    # ---- MLP: Linear -> ReLU -> Linear (bf16 MXU operands) ----
    h1 = jnp.dot(x1.astype(bf16), w1_ref[...],
                 preferred_element_type=f32) + b1_ref[...]
    h1 = jnp.maximum(h1, 0.0)
    fc = jnp.dot(h1.astype(bf16), w2_ref[...],
                 preferred_element_type=f32) + b2_ref[...]

    # ---- residual + LayerNorm2 ----
    x2 = _layernorm_f32(fc + x1, g2_ref[...], be2_ref[...], eps)

    # TODO(synk): nn.Dropout(p=0.0) is identity at inference; omitted.
    o_ref[...] = x2.reshape(bt, s, d).astype(o_ref.dtype)


def encoder_block_forward(x, params, *, num_heads, eps=1e-5, batch_tile=None):
    """Fused EncoderBlock forward.

    x: (B, S, D) float32.  params: dict with weights in (in, out) layout and
    biases / LayerNorm params of shape (1, dim).
    """
    B, S, D = x.shape
    assert D % num_heads == 0
    head_dim = D // num_heads
    scale = head_dim ** -0.5
    F = params["w1"].shape[1]

    # Batch several rows per grid step: fills MXU sublanes / amortizes the
    # per-step pipeline overhead when S*D is small.
    if batch_tile is None:
        batch_tile = 1
        row_budget = max(1, 2048 // max(S, 1))
        for cand in range(1, B + 1):
            if B % cand == 0 and cand <= row_budget:
                batch_tile = cand
    assert B % batch_tile == 0
    bt = batch_tile

    # bf16 weights: 2-4x MXU throughput and half the DMA/VMEM bytes.
    # Biases / LayerNorm params stay f32 (added to f32 accumulators).
    bf16, f32 = jnp.bfloat16, jnp.float32
    wq = params["wq"].astype(bf16); wk = params["wk"].astype(bf16)
    wv = params["wv"].astype(bf16); wo = params["wo"].astype(bf16)
    w1 = params["w1"].astype(bf16); w2 = params["w2"].astype(bf16)
    bq = params["bq"].astype(f32); bk = params["bk"].astype(f32)
    bv = params["bv"].astype(f32); bo = params["bo"].astype(f32)
    b1 = params["b1"].astype(f32); b2 = params["b2"].astype(f32)
    g1 = params["g1"].astype(f32); be1 = params["be1"].astype(f32)
    g2 = params["g2"].astype(f32); be2 = params["be2"].astype(f32)

    kernel = functools.partial(
        _encoder_block_kernel,
        num_heads=num_heads, head_dim=head_dim, scale=scale, eps=eps)

    def full(shape):
        # Weight/bias blocks: full array, constant block index every grid step
        # -> stays VMEM-resident (no re-DMA across steps).
        return pl.BlockSpec(shape, lambda b: (0,) * len(shape))

    in_specs = [
        pl.BlockSpec((bt, S, D), lambda b: (b, 0, 0)),   # x: batch tile
        full((D, D)), full((1, D)),                      # wq, bq
        full((D, D)), full((1, D)),                      # wk, bk
        full((D, D)), full((1, D)),                      # wv, bv
        full((D, D)), full((1, D)),                      # wo, bo
        full((1, D)), full((1, D)),                      # ln1 gamma, beta
        full((D, F)), full((1, F)),                      # w1, b1
        full((F, D)), full((1, D)),                      # w2, b2
        full((1, D)), full((1, D)),                      # ln2 gamma, beta
    ]

    # Explicit VMEM budget: bf16 weights + f32 activations for one tile,
    # with headroom; clamped to 64 MiB so it is valid on v7x as well.
    n = bt * S
    weight_bytes = 2 * (4 * D * D + 2 * D * F) + 4 * (7 * D + F)
    act_bytes = 4 * (n * (5 * D + 2 * F) + 2 * num_heads * bt * S * S)
    io_bytes = 4 * 2 * 2 * (bt * S * D)
    vmem_limit = int(min(max(2 * weight_bytes + 2 * act_bytes + io_bytes
                             + (8 << 20), 32 << 20), 64 << 20))

    return pl.pallas_call(
        kernel,
        out_shape=jax.ShapeDtypeStruct((B, S, D), x.dtype),
        grid_spec=pltpu.PrefetchScalarGridSpec(
            num_scalar_prefetch=0,
            grid=(B // bt,),
            in_specs=in_specs,
            out_specs=pl.BlockSpec((bt, S, D), lambda b: (b, 0, 0)),
        ),
        compiler_params=pltpu.CompilerParams(
            dimension_semantics=("parallel",),
            vmem_limit_bytes=vmem_limit,
        ),
    )(
        x,
        wq, bq, wk, bk, wv, bv, wo, bo,
        g1, be1,
        w1, b1, w2, b2,
        g2, be2,
    )


def _reference_encoder_block(x, p, *, num_heads, eps=1e-5):
    """Plain-JAX f32 reference mirroring the PyTorch EncoderBlock forward."""
    B, S, D = x.shape
    hd = D // num_heads
    scale = hd ** -0.5

    q = x @ p["wq"] + p["bq"][0]
    k = x @ p["wk"] + p["bk"][0]
    v = x @ p["wv"] + p["bv"][0]

    def split(t):  # (B, S, D) -> (B, H, S, hd)
        return t.reshape(B, S, num_heads, hd).transpose(0, 2, 1, 3)

    qh, kh, vh = split(q), split(k), split(v)
    scores = jnp.einsum("bhsd,bhtd->bhst", qh, kh) * scale
    attn = jax.nn.softmax(scores, axis=-1)
    out = jnp.einsum("bhst,bhtd->bhsd", attn, vh)
    out = out.transpose(0, 2, 1, 3).reshape(B, S, D)
    attn_out = out @ p["wo"] + p["bo"][0]

    def ln(t, g, b):
        m = t.mean(-1, keepdims=True)
        var = ((t - m) ** 2).mean(-1, keepdims=True)
        return (t - m) / jnp.sqrt(var + eps) * g[0] + b[0]

    x1 = ln(attn_out + x, p["g1"], p["be1"])
    h1 = jax.nn.relu(x1 @ p["w1"] + p["b1"][0])
    fc = h1 @ p["w2"] + p["b2"][0]
    return ln(fc + x1, p["g2"], p["be2"])


if __name__ == "__main__":
    # Small shapes consistent with the module: (batch, seq, embed), 4 heads.
    batch, seq, embed, num_heads = 2, 8, 32, 4
    fc_dim = 4 * embed

    key = jax.random.PRNGKey(0)
    keys = jax.random.split(key, 17)

    def w(k, shape, s=0.1):
        return (s * jax.random.normal(k, shape)).astype(jnp.float32)

    x = jax.random.normal(keys[0], (batch, seq, embed), dtype=jnp.float32)
    params = {
        "wq": w(keys[1], (embed, embed)), "bq": w(keys[2], (1, embed)),
        "wk": w(keys[3], (embed, embed)), "bk": w(keys[4], (1, embed)),
        "wv": w(keys[5], (embed, embed)), "bv": w(keys[6], (1, embed)),
        "wo": w(keys[7], (embed, embed)), "bo": w(keys[8], (1, embed)),
        "g1": 1.0 + w(keys[9], (1, embed)), "be1": w(keys[10], (1, embed)),
        "w1": w(keys[11], (embed, fc_dim)), "b1": w(keys[12], (1, fc_dim)),
        "w2": w(keys[13], (fc_dim, embed)), "b2": w(keys[14], (1, embed)),
        "g2": 1.0 + w(keys[15], (1, embed)), "be2": w(keys[16], (1, embed)),
    }

    out = encoder_block_forward(x, params, num_heads=num_heads)
    out = jax.block_until_ready(out)

    ref = _reference_encoder_block(x, params, num_heads=num_heads)
    assert out.shape == (batch, seq, embed)
    err = float(jnp.max(jnp.abs(out - ref)))
    # bf16 MXU operands -> compare against the f32 reference at bf16 tolerance.
    assert jnp.allclose(out, ref, atol=3e-2, rtol=3e-2), (
        f"mismatch vs reference, max err {err}")

    print("KERNEL_OK")
</pallas_src>

<mosaic_0001>
module attributes {stable_mosaic.version = 11 : i64} {
  func.func @_encoder_block_kernel(%arg0: i32, %arg1: memref<2x8x32xf32, #tpu.memory_space<vmem>>, %arg2: memref<32x32xbf16, #tpu.memory_space<vmem>>, %arg3: memref<1x32xf32, #tpu.memory_space<vmem>>, %arg4: memref<32x32xbf16, #tpu.memory_space<vmem>>, %arg5: memref<1x32xf32, #tpu.memory_space<vmem>>, %arg6: memref<32x32xbf16, #tpu.memory_space<vmem>>, %arg7: memref<1x32xf32, #tpu.memory_space<vmem>>, %arg8: memref<32x32xbf16, #tpu.memory_space<vmem>>, %arg9: memref<1x32xf32, #tpu.memory_space<vmem>>, %arg10: memref<1x32xf32, #tpu.memory_space<vmem>>, %arg11: memref<1x32xf32, #tpu.memory_space<vmem>>, %arg12: memref<32x128xbf16, #tpu.memory_space<vmem>>, %arg13: memref<1x128xf32, #tpu.memory_space<vmem>>, %arg14: memref<128x32xbf16, #tpu.memory_space<vmem>>, %arg15: memref<1x32xf32, #tpu.memory_space<vmem>>, %arg16: memref<1x32xf32, #tpu.memory_space<vmem>>, %arg17: memref<1x32xf32, #tpu.memory_space<vmem>>, %arg18: memref<2x8x32xf32, #tpu.memory_space<vmem>>) attributes {dimension_semantics = [#tpu.dimension_semantics<parallel>], iteration_bounds = array<i64: 1>, scalar_prefetch = 0 : i64, scratch_operands = 0 : i64, tpu.core_type = #tpu.core_type<tc>, window_params = [{transform_indices = @transform_0, window_bounds = array<i64: 2, 8, 32>}, {pipeline_mode = #tpu.pipeline_mode<synchronous>, transform_indices = @transform_1, window_bounds = array<i64: 32, 32>}, {pipeline_mode = #tpu.pipeline_mode<synchronous>, transform_indices = @transform_2, window_bounds = array<i64: 1, 32>}, {pipeline_mode = #tpu.pipeline_mode<synchronous>, transform_indices = @transform_3, window_bounds = array<i64: 32, 32>}, {pipeline_mode = #tpu.pipeline_mode<synchronous>, transform_indices = @transform_4, window_bounds = array<i64: 1, 32>}, {pipeline_mode = #tpu.pipeline_mode<synchronous>, transform_indices = @transform_5, window_bounds = array<i64: 32, 32>}, {pipeline_mode = #tpu.pipeline_mode<synchronous>, transform_indices = @transform_6, window_bounds = array<i64: 1, 32>}, {pipeline_mode = #tpu.pipeline_mode<synchronous>, transform_indices = @transform_7, window_bounds = array<i64: 32, 32>}, {pipeline_mode = #tpu.pipeline_mode<synchronous>, transform_indices = @transform_8, window_bounds = array<i64: 1, 32>}, {pipeline_mode = #tpu.pipeline_mode<synchronous>, transform_indices = @transform_9, window_bounds = array<i64: 1, 32>}, {pipeline_mode = #tpu.pipeline_mode<synchronous>, transform_indices = @transform_10, window_bounds = array<i64: 1, 32>}, {pipeline_mode = #tpu.pipeline_mode<synchronous>, transform_indices = @transform_11, window_bounds = array<i64: 32, 128>}, {pipeline_mode = #tpu.pipeline_mode<synchronous>, transform_indices = @transform_12, window_bounds = array<i64: 1, 128>}, {pipeline_mode = #tpu.pipeline_mode<synchronous>, transform_indices = @transform_13, window_bounds = array<i64: 128, 32>}, {pipeline_mode = #tpu.pipeline_mode<synchronous>, transform_indices = @transform_14, window_bounds = array<i64: 1, 32>}, {pipeline_mode = #tpu.pipeline_mode<synchronous>, transform_indices = @transform_15, window_bounds = array<i64: 1, 32>}, {pipeline_mode = #tpu.pipeline_mode<synchronous>, transform_indices = @transform_16, window_bounds = array<i64: 1, 32>}, {transform_indices = @transform_17, window_bounds = array<i64: 2, 8, 32>}]} {
    %c0 = arith.constant 0 : index
    %c0_0 = arith.constant 0 : index
    %c0_1 = arith.constant 0 : index
    %0 = vector.load %arg1[%c0, %c0_0, %c0_1] : memref<2x8x32xf32, #tpu.memory_space<vmem>>, vector<2x8x32xf32>
    %1 = vector.shape_cast %0 : vector<2x8x32xf32> to vector<16x32xf32>
    %2 = arith.truncf %1 : vector<16x32xf32> to vector<16x32xbf16>
    %c0_2 = arith.constant 0 : index
    %c0_3 = arith.constant 0 : index
    %3 = vector.load %arg2[%c0_2, %c0_3] : memref<32x32xbf16, #tpu.memory_space<vmem>>, vector<32x32xbf16>
    %cst = arith.constant dense<0.000000e+00> : vector<16x32xf32>
    %4 = tpu.matmul %2, %3, %cst {dimension_numbers = #tpu.dot_dimension_numbers<[1], [0], [0], [1], [0, 0, 1, 1], [], []>} : vector<16x32xbf16>, vector<32x32xbf16>, vector<16x32xf32> -> vector<16x32xf32>
    %c0_4 = arith.constant 0 : index
    %c0_5 = arith.constant 0 : index
    %5 = vector.load %arg3[%c0_4, %c0_5] : memref<1x32xf32, #tpu.memory_space<vmem>>, vector<1x32xf32>
    %6 = vector.broadcast %5 : vector<1x32xf32> to vector<16x32xf32>
    %7 = arith.addf %4, %6 : vector<16x32xf32>
    %c0_6 = arith.constant 0 : index
    %c0_7 = arith.constant 0 : index
    %8 = vector.load %arg4[%c0_6, %c0_7] : memref<32x32xbf16, #tpu.memory_space<vmem>>, vector<32x32xbf16>
    %cst_8 = arith.constant dense<0.000000e+00> : vector<16x32xf32>
    %9 = tpu.matmul %2, %8, %cst_8 {dimension_numbers = #tpu.dot_dimension_numbers<[1], [0], [0], [1], [0, 0, 1, 1], [], []>} : vector<16x32xbf16>, vector<32x32xbf16>, vector<16x32xf32> -> vector<16x32xf32>
    %c0_9 = arith.constant 0 : index
    %c0_10 = arith.constant 0 : index
    %10 = vector.load %arg5[%c0_9, %c0_10] : memref<1x32xf32, #tpu.memory_space<vmem>>, vector<1x32xf32>
    %11 = vector.broadcast %10 : vector<1x32xf32> to vector<16x32xf32>
    %12 = arith.addf %9, %11 : vector<16x32xf32>
    %c0_11 = arith.constant 0 : index
    %c0_12 = arith.constant 0 : index
    %13 = vector.load %arg6[%c0_11, %c0_12] : memref<32x32xbf16, #tpu.memory_space<vmem>>, vector<32x32xbf16>
    %cst_13 = arith.constant dense<0.000000e+00> : vector<16x32xf32>
    %14 = tpu.matmul %2, %13, %cst_13 {dimension_numbers = #tpu.dot_dimension_numbers<[1], [0], [0], [1], [0, 0, 1, 1], [], []>} : vector<16x32xbf16>, vector<32x32xbf16>, vector<16x32xf32> -> vector<16x32xf32>
    %c0_14 = arith.constant 0 : index
    %c0_15 = arith.constant 0 : index
    %15 = vector.load %arg7[%c0_14, %c0_15] : memref<1x32xf32, #tpu.memory_space<vmem>>, vector<1x32xf32>
    %16 = vector.broadcast %15 : vector<1x32xf32> to vector<16x32xf32>
    %17 = arith.addf %14, %16 : vector<16x32xf32>
    %cst_16 = arith.constant 0.353553385 : f32
    %18 = vector.broadcast %cst_16 : f32 to vector<16x32xf32>
    %19 = arith.mulf %7, %18 : vector<16x32xf32>
    %20 = vector.extract_strided_slice %19 {offsets = [0, 0], sizes = [16, 8], strides = [1, 1]} : vector<16x32xf32> to vector<16x8xf32>
    %21 = vector.shape_cast %20 : vector<16x8xf32> to vector<2x8x8xf32>
    %22 = vector.extract_strided_slice %19 {offsets = [0, 8], sizes = [16, 8], strides = [1, 1]} : vector<16x32xf32> to vector<16x8xf32>
    %23 = vector.shape_cast %22 : vector<16x8xf32> to vector<2x8x8xf32>
    %24 = vector.extract_strided_slice %19 {offsets = [0, 16], sizes = [16, 8], strides = [1, 1]} : vector<16x32xf32> to vector<16x8xf32>
    %25 = vector.shape_cast %24 : vector<16x8xf32> to vector<2x8x8xf32>
    %26 = vector.extract_strided_slice %19 {offsets = [0, 24], sizes = [16, 8], strides = [1, 1]} : vector<16x32xf32> to vector<16x8xf32>
    %27 = vector.shape_cast %26 : vector<16x8xf32> to vector<2x8x8xf32>
    %28 = vector.shape_cast %21 : vector<2x8x8xf32> to vector<1x2x8x8xf32>
    %29 = vector.shape_cast %23 : vector<2x8x8xf32> to vector<1x2x8x8xf32>
    %30 = vector.shape_cast %25 : vector<2x8x8xf32> to vector<1x2x8x8xf32>
    %31 = vector.shape_cast %27 : vector<2x8x8xf32> to vector<1x2x8x8xf32>
    %32 = tpu.concatenate %28, %29, %30, %31 in 0 : vector<1x2x8x8xf32>, vector<1x2x8x8xf32>, vector<1x2x8x8xf32>, vector<1x2x8x8xf32> -> vector<4x2x8x8xf32>
    %33 = vector.shape_cast %32 : vector<4x2x8x8xf32> to vector<8x8x8xf32>
    %34 = arith.truncf %33 : vector<8x8x8xf32> to vector<8x8x8xbf16>
    %35 = vector.extract_strided_slice %12 {offsets = [0, 0], sizes = [16, 8], strides = [1, 1]} : vector<16x32xf32> to vector<16x8xf32>
    %36 = vector.shape_cast %35 : vector<16x8xf32> to vector<2x8x8xf32>
    %37 = vector.extract_strided_slice %12 {offsets = [0, 8], sizes = [16, 8], strides = [1, 1]} : vector<16x32xf32> to vector<16x8xf32>
    %38 = vector.shape_cast %37 : vector<16x8xf32> to vector<2x8x8xf32>
    %39 = vector.extract_strided_slice %12 {offsets = [0, 16], sizes = [16, 8], strides = [1, 1]} : vector<16x32xf32> to vector<16x8xf32>
    %40 = vector.shape_cast %39 : vector<16x8xf32> to vector<2x8x8xf32>
    %41 = vector.extract_strided_slice %12 {offsets = [0, 24], sizes = [16, 8], strides = [1, 1]} : vector<16x32xf32> to vector<16x8xf32>
    %42 = vector.shape_cast %41 : vector<16x8xf32> to vector<2x8x8xf32>
    %43 = vector.shape_cast %36 : vector<2x8x8xf32> to vector<1x2x8x8xf32>
    %44 = vector.shape_cast %38 : vector<2x8x8xf32> to vector<1x2x8x8xf32>
    %45 = vector.shape_cast %40 : vector<2x8x8xf32> to vector<1x2x8x8xf32>
    %46 = vector.shape_cast %42 : vector<2x8x8xf32> to vector<1x2x8x8xf32>
    %47 = tpu.concatenate %43, %44, %45, %46 in 0 : vector<1x2x8x8xf32>, vector<1x2x8x8xf32>, vector<1x2x8x8xf32>, vector<1x2x8x8xf32> -> vector<4x2x8x8xf32>
    %48 = vector.shape_cast %47 : vector<4x2x8x8xf32> to vector<8x8x8xf32>
    %49 = arith.truncf %48 : vector<8x8x8xf32> to vector<8x8x8xbf16>
    %50 = vector.extract_strided_slice %17 {offsets = [0, 0], sizes = [16, 8], strides = [1, 1]} : vector<16x32xf32> to vector<16x8xf32>
    %51 = vector.shape_cast %50 : vector<16x8xf32> to vector<2x8x8xf32>
    %52 = vector.extract_strided_slice %17 {offsets = [0, 8], sizes = [16, 8], strides = [1, 1]} : vector<16x32xf32> to vector<16x8xf32>
    %53 = vector.shape_cast %52 : vector<16x8xf32> to vector<2x8x8xf32>
    %54 = vector.extract_strided_slice %17 {offsets = [0, 16], sizes = [16, 8], strides = [1, 1]} : vector<16x32xf32> to vector<16x8xf32>
    %55 = vector.shape_cast %54 : vector<16x8xf32> to vector<2x8x8xf32>
    %56 = vector.extract_strided_slice %17 {offsets = [0, 24], sizes = [16, 8], strides = [1, 1]} : vector<16x32xf32> to vector<16x8xf32>
    %57 = vector.shape_cast %56 : vector<16x8xf32> to vector<2x8x8xf32>
    %58 = vector.shape_cast %51 : vector<2x8x8xf32> to vector<1x2x8x8xf32>
    %59 = vector.shape_cast %53 : vector<2x8x8xf32> to vector<1x2x8x8xf32>
    %60 = vector.shape_cast %55 : vector<2x8x8xf32> to vector<1x2x8x8xf32>
    %61 = vector.shape_cast %57 : vector<2x8x8xf32> to vector<1x2x8x8xf32>
    %62 = tpu.concatenate %58, %59, %60, %61 in 0 : vector<1x2x8x8xf32>, vector<1x2x8x8xf32>, vector<1x2x8x8xf32>, vector<1x2x8x8xf32> -> vector<4x2x8x8xf32>
    %63 = vector.shape_cast %62 : vector<4x2x8x8xf32> to vector<8x8x8xf32>
    %64 = arith.truncf %63 : vector<8x8x8xf32> to vector<8x8x8xbf16>
    "tpu.trace_start"() <{level = 10 : i32, message = "bqd,bkd->bqk"}> : () -> ()
    %cst_17 = arith.constant dense<0.000000e+00> : vector<8x8x8xf32>
    %65 = tpu.matmul %34, %49, %cst_17 {dimension_numbers = #tpu.dot_dimension_numbers<[2], [2], [1], [1], [0, 0, 0, 1, 1, 1], [0], [0]>} : vector<8x8x8xbf16>, vector<8x8x8xbf16>, vector<8x8x8xf32> -> vector<8x8x8xf32>
    "tpu.trace_stop"() : () -> ()
    %cst_18 = arith.constant dense<0xFF800000> : vector<8x8xf32>
    %66 = vector.multi_reduction <maximumf>, %65, %cst_18 [2] : vector<8x8x8xf32> to vector<8x8xf32>
    %67 = vector.shape_cast %66 : vector<8x8xf32> to vector<8x8x1xf32>
    %68 = vector.broadcast %67 : vector<8x8x1xf32> to vector<8x8x8xf32>
    %69 = arith.subf %65, %68 : vector<8x8x8xf32>
    %70 = math.exp %69 : vector<8x8x8xf32>
    %cst_19 = arith.constant dense<0.000000e+00> : vector<8x8xf32>
    %71 = vector.multi_reduction <add>, %70, %cst_19 [2] : vector<8x8x8xf32> to vector<8x8xf32>
    %72 = vector.shape_cast %71 : vector<8x8xf32> to vector<8x8x1xf32>
    %73 = tpu.reciprocal %72 {approx = true} : vector<8x8x1xf32> -> vector<8x8x1xf32>
    %74 = vector.broadcast %73 : vector<8x8x1xf32> to vector<8x8x8xf32>
    %75 = arith.mulf %70, %74 : vector<8x8x8xf32>
    %76 = arith.truncf %75 : vector<8x8x8xf32> to vector<8x8x8xbf16>
    "tpu.trace_start"() <{level = 10 : i32, message = "bqk,bkd->bqd"}> : () -> ()
    %cst_20 = arith.constant dense<0.000000e+00> : vector<8x8x8xf32>
    %77 = tpu.matmul %76, %64, %cst_20 {dimension_numbers = #tpu.dot_dimension_numbers<[2], [1], [1], [2], [0, 0, 0, 1, 1, 2], [0], [0]>} : vector<8x8x8xbf16>, vector<8x8x8xbf16>, vector<8x8x8xf32> -> vector<8x8x8xf32>
    "tpu.trace_stop"() : () -> ()
    %78 = vector.shape_cast %77 : vector<8x8x8xf32> to vector<4x2x8x8xf32>
    %79 = vector.extract_strided_slice %78 {offsets = [0, 0, 0, 0], sizes = [1, 2, 8, 8], strides = [1, 1, 1, 1]} : vector<4x2x8x8xf32> to vector<1x2x8x8xf32>
    %80 = vector.shape_cast %79 : vector<1x2x8x8xf32> to vector<2x8x8xf32>
    %81 = vector.extract_strided_slice %78 {offsets = [1, 0, 0, 0], sizes = [1, 2, 8, 8], strides = [1, 1, 1, 1]} : vector<4x2x8x8xf32> to vector<1x2x8x8xf32>
    %82 = vector.shape_cast %81 : vector<1x2x8x8xf32> to vector<2x8x8xf32>
    %83 = vector.extract_strided_slice %78 {offsets = [2, 0, 0, 0], sizes = [1, 2, 8, 8], strides = [1, 1, 1, 1]} : vector<4x2x8x8xf32> to vector<1x2x8x8xf32>
    %84 = vector.shape_cast %83 : vector<1x2x8x8xf32> to vector<2x8x8xf32>
    %85 = vector.extract_strided_slice %78 {offsets = [3, 0, 0, 0], sizes = [1, 2, 8, 8], strides = [1, 1, 1, 1]} : vector<4x2x8x8xf32> to vector<1x2x8x8xf32>
    %86 = vector.shape_cast %85 : vector<1x2x8x8xf32> to vector<2x8x8xf32>
    %87 = tpu.concatenate %80, %82, %84, %86 in 2 : vector<2x8x8xf32>, vector<2x8x8xf32>, vector<2x8x8xf32>, vector<2x8x8xf32> -> vector<2x8x32xf32>
    %88 = vector.shape_cast %87 : vector<2x8x32xf32> to vector<16x32xf32>
    %89 = arith.truncf %88 : vector<16x32xf32> to vector<16x32xbf16>
    %c0_21 = arith.constant 0 : index
    %c0_22 = arith.constant 0 : index
    %90 = vector.load %arg8[%c0_21, %c0_22] : memref<32x32xbf16, #tpu.memory_space<vmem>>, vector<32x32xbf16>
    %cst_23 = arith.constant dense<0.000000e+00> : vector<16x32xf32>
    %91 = tpu.matmul %89, %90, %cst_23 {dimension_numbers = #tpu.dot_dimension_numbers<[1], [0], [0], [1], [0, 0, 1, 1], [], []>} : vector<16x32xbf16>, vector<32x32xbf16>, vector<16x32xf32> -> vector<16x32xf32>
    %c0_24 = arith.constant 0 : index
    %c0_25 = arith.constant 0 : index
    %92 = vector.load %arg9[%c0_24, %c0_25] : memref<1x32xf32, #tpu.memory_space<vmem>>, vector<1x32xf32>
    %93 = vector.broadcast %92 : vector<1x32xf32> to vector<16x32xf32>
    %94 = arith.addf %91, %93 : vector<16x32xf32>
    %95 = arith.addf %94, %1 : vector<16x32xf32>
    %c0_26 = arith.constant 0 : index
    %c0_27 = arith.constant 0 : index
    %96 = vector.load %arg10[%c0_26, %c0_27] : memref<1x32xf32, #tpu.memory_space<vmem>>, vector<1x32xf32>
    %c0_28 = arith.constant 0 : index
    %c0_29 = arith.constant 0 : index
    %97 = vector.load %arg11[%c0_28, %c0_29] : memref<1x32xf32, #tpu.memory_space<vmem>>, vector<1x32xf32>
    %cst_30 = arith.constant dense<0.000000e+00> : vector<16xf32>
    %98 = vector.multi_reduction <add>, %95, %cst_30 [1] : vector<16x32xf32> to vector<16xf32>
    %99 = vector.shape_cast %98 : vector<16xf32> to vector<16x1xf32>
    %cst_31 = arith.constant 3.200000e+01 : f32
    %100 = vector.broadcast %cst_31 : f32 to vector<16x1xf32>
    %101 = arith.divf %99, %100 : vector<16x1xf32>
    %102 = vector.broadcast %101 : vector<16x1xf32> to vector<16x32xf32>
    %103 = arith.subf %95, %102 : vector<16x32xf32>
    %104 = arith.mulf %103, %103 : vector<16x32xf32>
    %cst_32 = arith.constant dense<0.000000e+00> : vector<16xf32>
    %105 = vector.multi_reduction <add>, %104, %cst_32 [1] : vector<16x32xf32> to vector<16xf32>
    %106 = vector.shape_cast %105 : vector<16xf32> to vector<16x1xf32>
    %cst_33 = arith.constant 3.200000e+01 : f32
    %107 = vector.broadcast %cst_33 : f32 to vector<16x1xf32>
    %108 = arith.divf %106, %107 : vector<16x1xf32>
    %cst_34 = arith.constant 9.99999974E-6 : f32
    %109 = vector.broadcast %cst_34 : f32 to vector<16x1xf32>
    %110 = arith.addf %108, %109 : vector<16x1xf32>
    %111 = math.rsqrt %110 : vector<16x1xf32>
    %112 = vector.broadcast %111 : vector<16x1xf32> to vector<16x32xf32>
    %113 = arith.mulf %103, %112 : vector<16x32xf32>
    %114 = vector.broadcast %96 : vector<1x32xf32> to vector<16x32xf32>
    %115 = arith.mulf %113, %114 : vector<16x32xf32>
    %116 = vector.broadcast %97 : vector<1x32xf32> to vector<16x32xf32>
    %117 = arith.addf %115, %116 : vector<16x32xf32>
    %118 = arith.truncf %117 : vector<16x32xf32> to vector<16x32xbf16>
    %c0_35 = arith.constant 0 : index
    %c0_36 = arith.constant 0 : index
    %119 = vector.load %arg12[%c0_35, %c0_36] : memref<32x128xbf16, #tpu.memory_space<vmem>>, vector<32x128xbf16>
    %cst_37 = arith.constant dense<0.000000e+00> : vector<16x128xf32>
    %120 = tpu.matmul %118, %119, %cst_37 {dimension_numbers = #tpu.dot_dimension_numbers<[1], [0], [0], [1], [0, 0, 1, 1], [], []>} : vector<16x32xbf16>, vector<32x128xbf16>, vector<16x128xf32> -> vector<16x128xf32>
    %c0_38 = arith.constant 0 : index
    %c0_39 = arith.constant 0 : index
    %121 = vector.load %arg13[%c0_38, %c0_39] : memref<1x128xf32, #tpu.memory_space<vmem>>, vector<1x128xf32>
    %122 = vector.broadcast %121 : vector<1x128xf32> to vector<16x128xf32>
    %123 = arith.addf %120, %122 : vector<16x128xf32>
    %cst_40 = arith.constant 0.000000e+00 : f32
    %124 = vector.broadcast %cst_40 : f32 to vector<16x128xf32>
    %125 = arith.maximumf %123, %124 : vector<16x128xf32>
    %126 = arith.truncf %125 : vector<16x128xf32> to vector<16x128xbf16>
    %c0_41 = arith.constant 0 : index
    %c0_42 = arith.constant 0 : index
    %127 = vector.load %arg14[%c0_41, %c0_42] : memref<128x32xbf16, #tpu.memory_space<vmem>>, vector<128x32xbf16>
    %cst_43 = arith.constant dense<0.000000e+00> : vector<16x32xf32>
    %128 = tpu.matmul %126, %127, %cst_43 {dimension_numbers = #tpu.dot_dimension_numbers<[1], [0], [0], [1], [0, 0, 1, 1], [], []>} : vector<16x128xbf16>, vector<128x32xbf16>, vector<16x32xf32> -> vector<16x32xf32>
    %c0_44 = arith.constant 0 : index
    %c0_45 = arith.constant 0 : index
    %129 = vector.load %arg15[%c0_44, %c0_45] : memref<1x32xf32, #tpu.memory_space<vmem>>, vector<1x32xf32>
    %130 = vector.broadcast %129 : vector<1x32xf32> to vector<16x32xf32>
    %131 = arith.addf %128, %130 : vector<16x32xf32>
    %132 = arith.addf %131, %117 : vector<16x32xf32>
    %c0_46 = arith.constant 0 : index
    %c0_47 = arith.constant 0 : index
    %133 = vector.load %arg16[%c0_46, %c0_47] : memref<1x32xf32, #tpu.memory_space<vmem>>, vector<1x32xf32>
    %c0_48 = arith.constant 0 : index
    %c0_49 = arith.constant 0 : index
    %134 = vector.load %arg17[%c0_48, %c0_49] : memref<1x32xf32, #tpu.memory_space<vmem>>, vector<1x32xf32>
    %cst_50 = arith.constant dense<0.000000e+00> : vector<16xf32>
    %135 = vector.multi_reduction <add>, %132, %cst_50 [1] : vector<16x32xf32> to vector<16xf32>
    %136 = vector.shape_cast %135 : vector<16xf32> to vector<16x1xf32>
    %cst_51 = arith.constant 3.200000e+01 : f32
    %137 = vector.broadcast %cst_51 : f32 to vector<16x1xf32>
    %138 = arith.divf %136, %137 : vector<16x1xf32>
    %139 = vector.broadcast %138 : vector<16x1xf32> to vector<16x32xf32>
    %140 = arith.subf %132, %139 : vector<16x32xf32>
    %141 = arith.mulf %140, %140 : vector<16x32xf32>
    %cst_52 = arith.constant dense<0.000000e+00> : vector<16xf32>
    %142 = vector.multi_reduction <add>, %141, %cst_52 [1] : vector<16x32xf32> to vector<16xf32>
    %143 = vector.shape_cast %142 : vector<16xf32> to vector<16x1xf32>
    %cst_53 = arith.constant 3.200000e+01 : f32
    %144 = vector.broadcast %cst_53 : f32 to vector<16x1xf32>
    %145 = arith.divf %143, %144 : vector<16x1xf32>
    %cst_54 = arith.constant 9.99999974E-6 : f32
    %146 = vector.broadcast %cst_54 : f32 to vector<16x1xf32>
    %147 = arith.addf %145, %146 : vector<16x1xf32>
    %148 = math.rsqrt %147 : vector<16x1xf32>
    %149 = vector.broadcast %148 : vector<16x1xf32> to vector<16x32xf32>
    %150 = arith.mulf %140, %149 : vector<16x32xf32>
    %151 = vector.broadcast %133 : vector<1x32xf32> to vector<16x32xf32>
    %152 = arith.mulf %150, %151 : vector<16x32xf32>
    %153 = vector.broadcast %134 : vector<1x32xf32> to vector<16x32xf32>
    %154 = arith.addf %152, %153 : vector<16x32xf32>
    %155 = vector.shape_cast %154 : vector<16x32xf32> to vector<2x8x32xf32>
    %c0_55 = arith.constant 0 : index
    %c0_56 = arith.constant 0 : index
    %c0_57 = arith.constant 0 : index
    %156 = vector.load %arg18[%c0_55, %c0_56, %c0_57] : memref<2x8x32xf32, #tpu.memory_space<vmem>>, vector<2x8x32xf32>
    tpu.vector_store %arg18[%c0_55, %c0_56, %c0_57], %155 {strides = array<i32>} : memref<2x8x32xf32, #tpu.memory_space<vmem>>, vector<2x8x32xf32>,
    return
  }
  func.func @transform_0(%arg0: i32) -> (i32, i32, i32) {
    %c0_i32 = arith.constant 0 : i32
    %c0_i32_0 = arith.constant 0 : i32
    %c0_i32_1 = arith.constant 0 : i32
    return %arg0, %c0_i32, %c0_i32_0 : i32, i32, i32
  }
  func.func @transform_1(%arg0: i32) -> (i32, i32) {
    %c0_i32 = arith.constant 0 : i32
    %c0_i32_0 = arith.constant 0 : i32
    %c0_i32_1 = arith.constant 0 : i32
    return %c0_i32, %c0_i32_0 : i32, i32
  }
  func.func @transform_2(%arg0: i32) -> (i32, i32) {
    %c0_i32 = arith.constant 0 : i32
    %c0_i32_0 = arith.constant 0 : i32
    %c0_i32_1 = arith.constant 0 : i32
    return %c0_i32, %c0_i32_0 : i32, i32
  }
  func.func @transform_3(%arg0: i32) -> (i32, i32) {
    %c0_i32 = arith.constant 0 : i32
    %c0_i32_0 = arith.constant 0 : i32
    %c0_i32_1 = arith.constant 0 : i32
    return %c0_i32, %c0_i32_0 : i32, i32
  }
  func.func @transform_4(%arg0: i32) -> (i32, i32) {
    %c0_i32 = arith.constant 0 : i32
    %c0_i32_0 = arith.constant 0 : i32
    %c0_i32_1 = arith.constant 0 : i32
    return %c0_i32, %c0_i32_0 : i32, i32
  }
  func.func @transform_5(%arg0: i32) -> (i32, i32) {
    %c0_i32 = arith.constant 0 : i32
    %c0_i32_0 = arith.constant 0 : i32
    %c0_i32_1 = arith.constant 0 : i32
    return %c0_i32, %c0_i32_0 : i32, i32
  }
  func.func @transform_6(%arg0: i32) -> (i32, i32) {
    %c0_i32 = arith.constant 0 : i32
    %c0_i32_0 = arith.constant 0 : i32
    %c0_i32_1 = arith.constant 0 : i32
    return %c0_i32, %c0_i32_0 : i32, i32
  }
  func.func @transform_7(%arg0: i32) -> (i32, i32) {
    %c0_i32 = arith.constant 0 : i32
    %c0_i32_0 = arith.constant 0 : i32
    %c0_i32_1 = arith.constant 0 : i32
    return %c0_i32, %c0_i32_0 : i32, i32
  }
  func.func @transform_8(%arg0: i32) -> (i32, i32) {
    %c0_i32 = arith.constant 0 : i32
    %c0_i32_0 = arith.constant 0 : i32
    %c0_i32_1 = arith.constant 0 : i32
    return %c0_i32, %c0_i32_0 : i32, i32
  }
  func.func @transform_9(%arg0: i32) -> (i32, i32) {
    %c0_i32 = arith.constant 0 : i32
    %c0_i32_0 = arith.constant 0 : i32
    %c0_i32_1 = arith.constant 0 : i32
    return %c0_i32, %c0_i32_0 : i32, i32
  }
  func.func @transform_10(%arg0: i32) -> (i32, i32) {
    %c0_i32 = arith.constant 0 : i32
    %c0_i32_0 = arith.constant 0 : i32
    %c0_i32_1 = arith.constant 0 : i32
    return %c0_i32, %c0_i32_0 : i32, i32
  }
  func.func @transform_11(%arg0: i32) -> (i32, i32) {
    %c0_i32 = arith.constant 0 : i32
    %c0_i32_0 = arith.constant 0 : i32
    %c0_i32_1 = arith.constant 0 : i32
    return %c0_i32, %c0_i32_0 : i32, i32
  }
  func.func @transform_12(%arg0: i32) -> (i32, i32) {
    %c0_i32 = arith.constant 0 : i32
    %c0_i32_0 = arith.constant 0 : i32
    %c0_i32_1 = arith.constant 0 : i32
    return %c0_i32, %c0_i32_0 : i32, i32
  }
  func.func @transform_13(%arg0: i32) -> (i32, i32) {
    %c0_i32 = arith.constant 0 : i32
    %c0_i32_0 = arith.constant 0 : i32
    %c0_i32_1 = arith.constant 0 : i32
    return %c0_i32, %c0_i32_0 : i32, i32
  }
  func.func @transform_14(%arg0: i32) -> (i32, i32) {
    %c0_i32 = arith.constant 0 : i32
    %c0_i32_0 = arith.constant 0 : i32
    %c0_i32_1 = arith.constant 0 : i32
    return %c0_i32, %c0_i32_0 : i32, i32
  }
  func.func @transform_15(%arg0: i32) -> (i32, i32) {
    %c0_i32 = arith.constant 0 : i32
    %c0_i32_0 = arith.constant 0 : i32
    %c0_i32_1 = arith.constant 0 : i32
    return %c0_i32, %c0_i32_0 : i32, i32
  }
  func.func @transform_16(%arg0: i32) -> (i32, i32) {
    %c0_i32 = arith.constant 0 : i32
    %c0_i32_0 = arith.constant 0 : i32
    %c0_i32_1 = arith.constant 0 : i32
    return %c0_i32, %c0_i32_0 : i32, i32
  }
  func.func @transform_17(%arg0: i32) -> (i32, i32, i32) {
    %c0_i32 = arith.constant 0 : i32
    %c0_i32_0 = arith.constant 0 : i32
    %c0_i32_1 = arith.constant 0 : i32
    return %arg0, %c0_i32, %c0_i32_0 : i32, i32, i32
  }
}

</mosaic_0001>

<llo_original>
// kernel: tpu_custom_call.1
$region0: #{tpu_custom_call.1}
  #allocation0 [shape = 'u32[]', space=smem, size = 0x4, offset = 0x4, fixed_abs, tag = 'smem constant byte address 0x4 - core index']
  #allocation1 [shape = 'u32[144,128]{1,0:T(1,128)}', space=vmem, size = 0x12000, scoped, tag = 'internal scratch']
  %s0 = inlined_call_operand.vmem [shape: f32[2,8,32], index: 0, kind: input, shape index: {}]
  %s1 = inlined_call_operand.vmem [shape: bf16[32,32], index: 1, kind: input, shape index: {}]
  %s2 = inlined_call_operand.vmem [shape: f32[1,32], index: 2, kind: input, shape index: {}]
  %s3 = inlined_call_operand.vmem [shape: bf16[32,32], index: 3, kind: input, shape index: {}]
  %s4 = inlined_call_operand.vmem [shape: f32[1,32], index: 4, kind: input, shape index: {}]
  %s5 = inlined_call_operand.vmem [shape: bf16[32,32], index: 5, kind: input, shape index: {}]
  %s6 = inlined_call_operand.hbm [shape: f32[1,32], index: 6, kind: input, shape index: {}]
  %s7 = inlined_call_operand.vmem [shape: bf16[32,32], index: 7, kind: input, shape index: {}]
  %s8 = inlined_call_operand.hbm [shape: f32[1,32], index: 8, kind: input, shape index: {}]
  %s9 = inlined_call_operand.hbm [shape: f32[1,32], index: 9, kind: input, shape index: {}]
  %s10 = inlined_call_operand.vmem [shape: f32[1,32], index: 10, kind: input, shape index: {}]
  %s11 = inlined_call_operand.vmem [shape: bf16[32,128], index: 11, kind: input, shape index: {}]
  %s12 = inlined_call_operand.vmem [shape: f32[1,128], index: 12, kind: input, shape index: {}]
  %s13 = inlined_call_operand.vmem [shape: bf16[128,32], index: 13, kind: input, shape index: {}]
  %s14 = inlined_call_operand.vmem [shape: f32[1,32], index: 14, kind: input, shape index: {}]
  %s15 = inlined_call_operand.vmem [shape: f32[1,32], index: 15, kind: input, shape index: {}]
  %s16 = inlined_call_operand.vmem [shape: f32[1,32], index: 16, kind: input, shape index: {}]
  %s17 = inlined_call_operand.hbm [shape: f32[2,8,32], index: 17, kind: output, shape index: {}]
  %s18 = sld [smem:[#allocation0]]
  $region90: #{tpu_custom_call.1} parent=0
    _
  %s20 = ssub.s32 1, %s18
  %s21 = scalar_select 0, %s20, %s18
  $region1: #{tpu_custom_call.1} parent=0
    #allocation2 [shape = 'u8[512]{0}', space=vmem, size = 0x400, scoped, tag = 'input window, operand 6, single buffered']
    #allocation3 [shape = 's32[1]{0}', space=sflag, size = 0x4, scoped, tag = 'scoped memory for tpu_custom_call.1']
    #allocation4 [shape = 's32[1]{0}', space=sflag, size = 0x4, scoped, tag = 'scoped memory for tpu_custom_call.1']
    #allocation5 [shape = 'u8[512]{0}', space=vmem, size = 0x400, scoped, tag = 'input window, operand 8, single buffered']
    #allocation6 [shape = 's32[1]{0}', space=sflag, size = 0x4, scoped, tag = 'scoped memory for tpu_custom_call.1']
    #allocation7 [shape = 'u8[512]{0}', space=vmem, size = 0x400, scoped, tag = 'input window, operand 9, single buffered']
    #allocation8 [shape = 'u8[8192]{0}', space=vmem, size = 0x2000, scoped, tag = 'output window, operand 0, single buffered']
    %22 = vsyncpa [#allocation3], 0
    %23 = vsyncpa [#allocation6], 0
    %24 = vsyncpa [#allocation4], 0
    // Predicated region
    $region2: #{tpu_custom_call.1} parent=1 // pred_check
      _
    $region3: #{tpu_custom_call.1} parent=1 // pred_check_branch
      %26 = sbr.rel (0) target = $region5
    $region4: #{tpu_custom_call.1} parent=1 // pred_region
      _
    $region5: #{tpu_custom_call.1} parent=1 // pred_fallthru
      _
    // Predicated region
    $region6: #{tpu_custom_call.1} parent=1 // pred_check
      _
    $region7: #{tpu_custom_call.1} parent=1 // pred_check_branch
      %28 = sbr.rel (0) target = $region9
    $region8: #{tpu_custom_call.1} parent=1 // pred_region
      _
    $region9: #{tpu_custom_call.1} parent=1 // pred_fallthru
      _
    // Predicated region
    $region10: #{tpu_custom_call.1} parent=1 // pred_check
      _
    $region11: #{tpu_custom_call.1} parent=1 // pred_check_branch
      %30 = sbr.rel (0) target = $region13
    $region12: #{tpu_custom_call.1} parent=1 // pred_region
      _
    $region13: #{tpu_custom_call.1} parent=1 // pred_fallthru
      _
    // Predicated region
    $region14: #{tpu_custom_call.1} parent=1 // pred_check
      _
    $region15: #{tpu_custom_call.1} parent=1 // pred_check_branch
      %32 = sbr.rel (0) target = $region17
    $region16: #{tpu_custom_call.1} parent=1 // pred_region
      _
    $region17: #{tpu_custom_call.1} parent=1 // pred_fallthru
      _
    // Predicated region
    $region18: #{tpu_custom_call.1} parent=1 // pred_check
      _
    $region19: #{tpu_custom_call.1} parent=1 // pred_check_branch
      %34 = sbr.rel (0) target = $region21
    $region20: #{tpu_custom_call.1} parent=1 // pred_region
      _
    $region21: #{tpu_custom_call.1} parent=1 // pred_fallthru
      _
    // Predicated region
    $region22: #{tpu_custom_call.1} parent=1 // pred_check
      _
    $region23: #{tpu_custom_call.1} parent=1 // pred_check_branch
      %36 = sbr.rel (0) target = $region25
    $region24: #{tpu_custom_call.1} parent=1 // pred_region
      _
    $region25: #{tpu_custom_call.1} parent=1 // pred_fallthru
      _
    // Predicated region
    $region26: #{tpu_custom_call.1} parent=1 // pred_check
      _
    $region27: #{tpu_custom_call.1} parent=1 // pred_check_branch
      %38 = sbr.rel (0) target = $region29
    $region28: #{tpu_custom_call.1} parent=1 // pred_region
      %s40 = ssub.s32 16, 16
      %41 = vsyncadd [#allocation3], %s40
      %s43 = sshll.u32 [#allocation2], 4
      %s44 = int_to_ptr.vmem [resolvable:$true] %s43
      %46 = dma.hbm_to_vmem [thread:$0]  %s6, 16, %s44, [#allocation3]
    $region29: #{tpu_custom_call.1} parent=1 // pred_fallthru
      _
    // Predicated region
    $region30: #{tpu_custom_call.1} parent=1 // pred_check
      _
    $region31: #{tpu_custom_call.1} parent=1 // pred_check_branch
      %48 = sbr.rel (0) target = $region33
    $region32: #{tpu_custom_call.1} parent=1 // pred_region
      _
    $region33: #{tpu_custom_call.1} parent=1 // pred_fallthru
      _
    // Predicated region
    $region34: #{tpu_custom_call.1} parent=1 // pred_check
      _
    $region35: #{tpu_custom_call.1} parent=1 // pred_check_branch
      %50 = sbr.rel (0) target = $region37
    $region36: #{tpu_custom_call.1} parent=1 // pred_region
      %s52 = ssub.s32 16, 16
      %53 = vsyncadd [#allocation6], %s52
      %s55 = sshll.u32 [#allocation5], 4
      %s56 = int_to_ptr.vmem [resolvable:$true] %s55
      %58 = dma.hbm_to_vmem [thread:$0]  %s8, 16, %s56, [#allocation6]
    $region37: #{tpu_custom_call.1} parent=1 // pred_fallthru
      _
    // Predicated region
    $region38: #{tpu_custom_call.1} parent=1 // pred_check
      _
    $region39: #{tpu_custom_call.1} parent=1 // pred_check_branch
      %60 = sbr.rel (0) target = $region41
    $region40: #{tpu_custom_call.1} parent=1 // pred_region
      %s62 = ssub.s32 16, 16
      %63 = vsyncadd [#allocation6], %s62
      %s65 = sshll.u32 [#allocation7], 4
      %s66 = int_to_ptr.vmem [resolvable:$true] %s65
      %68 = dma.hbm_to_vmem [thread:$0]  %s9, 16, %s66, [#allocation6]
    $region41: #{tpu_custom_call.1} parent=1 // pred_fallthru
      _
    // Predicated region
    $region42: #{tpu_custom_call.1} parent=1 // pred_check
      _
    $region43: #{tpu_custom_call.1} parent=1 // pred_check_branch
      %70 = sbr.rel (0) target = $region45
    $region44: #{tpu_custom_call.1} parent=1 // pred_region
      _
    $region45: #{tpu_custom_call.1} parent=1 // pred_fallthru
      _
    // Predicated region
    $region46: #{tpu_custom_call.1} parent=1 // pred_check
      _
    $region47: #{tpu_custom_call.1} parent=1 // pred_check_branch
      %72 = sbr.rel (0) target = $region49
    $region48: #{tpu_custom_call.1} parent=1 // pred_region
      _
    $region49: #{tpu_custom_call.1} parent=1 // pred_fallthru
      _
    // Predicated region
    $region50: #{tpu_custom_call.1} parent=1 // pred_check
      _
    $region51: #{tpu_custom_call.1} parent=1 // pred_check_branch
      %74 = sbr.rel (0) target = $region53
    $region52: #{tpu_custom_call.1} parent=1 // pred_region
      _
    $region53: #{tpu_custom_call.1} parent=1 // pred_fallthru
      _
    // Predicated region
    $region54: #{tpu_custom_call.1} parent=1 // pred_check
      _
    $region55: #{tpu_custom_call.1} parent=1 // pred_check_branch
      %76 = sbr.rel (0) target = $region57
    $region56: #{tpu_custom_call.1} parent=1 // pred_region
      _
    $region57: #{tpu_custom_call.1} parent=1 // pred_fallthru
      _
    // Predicated region
    $region58: #{tpu_custom_call.1} parent=1 // pred_check
      _
    $region59: #{tpu_custom_call.1} parent=1 // pred_check_branch
      %78 = sbr.rel (0) target = $region61
    $region60: #{tpu_custom_call.1} parent=1 // pred_region
      _
    $region61: #{tpu_custom_call.1} parent=1 // pred_fallthru
      _
    // Predicated region
    $region62: #{tpu_custom_call.1} parent=1 // pred_check
      _
    $region63: #{tpu_custom_call.1} parent=1 // pred_check_branch
      %80 = sbr.rel (0) target = $region65
    $region64: #{tpu_custom_call.1} parent=1 // pred_region
      _
    $region65: #{tpu_custom_call.1} parent=1 // pred_fallthru
      _
    // Predicated region
    $region66: #{tpu_custom_call.1} parent=1 // pred_check
      _
    $region67: #{tpu_custom_call.1} parent=1 // pred_check_branch
      %82 = sbr.rel (0) target = $region69
    $region68: #{tpu_custom_call.1} parent=1 // pred_region
      _
    $region69: #{tpu_custom_call.1} parent=1 // pred_fallthru
      _
    // Predicated region
    $region70: #{tpu_custom_call.1} parent=1 // pred_check
      _
    $region71: #{tpu_custom_call.1} parent=1 // pred_check_branch
      %84 = sbr.rel (0) target = $region73
    $region72: #{tpu_custom_call.1} parent=1 // pred_region
      %85 = dma.done [#allocation3], 16
    $region73: #{tpu_custom_call.1} parent=1 // pred_fallthru
      _
    // Predicated region
    $region74: #{tpu_custom_call.1} parent=1 // pred_check
      _
    $region75: #{tpu_custom_call.1} parent=1 // pred_check_branch
      %87 = sbr.rel (0) target = $region77
    $region76: #{tpu_custom_call.1} parent=1 // pred_region
      %88 = dma.done [#allocation6], 16
    $region77: #{tpu_custom_call.1} parent=1 // pred_fallthru
      _
    // Predicated region
    $region78: #{tpu_custom_call.1} parent=1 // pred_check
      _
    $region79: #{tpu_custom_call.1} parent=1 // pred_check_branch
      %90 = sbr.rel (0) target = $region81
    $region80: #{tpu_custom_call.1} parent=1 // pred_region
      %91 = dma.done [#allocation6], 16
    $region81: #{tpu_custom_call.1} parent=1 // pred_fallthru
      _
    %v93 = vld [vmem:[%s0] sm:$0xff]
    %v94 = vld [vmem:[%s0 + $0x8] sm:$0xff]
    %v95 = vpack.c.bf16 %v94, %v93
    %v96 = vld [vmem:[%s1] sm:$0xf]
    %v97 = vld [vmem:[%s1 + $0x4] sm:$0xf]
    %v98 = vld [vmem:[%s1 + $0x8] sm:$0xf]
    %v99 = vld [vmem:[%s1 + $0xc] sm:$0xf]
    %v100 = vld [vmem:[%s2] sm:$0x1]
    %v102 = vlaneseq
    %v103 = vshrl.u32 %v102, 7
    %v104 = vsub.s32 0, %v103
    %v105 = vrot.slane %v100, %v104
    %v111 = vunpack.c.l.b16 %v96
    %v112 = vunpack.c.l.b16 %v97
    %v113 = vunpack.c.l.b16 %v98
    %v114 = vunpack.c.l.b16 %v99
    %v115 = vpack.c.b16 %v112, %v111
    %v116 = vpack.c.b16 %v114, %v113
    %vm119 = vcmask 261120
    %v121 = vsel %vm119, %v95, 0
    %123 = vmatprep.subr.bf16.mxu0 0
    %124 = vmatpush1.bf16.msra.mxu0 %v115
    %125 = vmatprep.subr.bf16.mxu0 0
    %126 = vmatpush1.bf16.msra.mxu0 %v116
    %127 = vmatprep.subr.bf16.mxu0 0
    %128 = vmatpush1.bf16.msra.mxu0 0
    %129 = vmatprep.subr.bf16.mxu0 0
    %130 = vmatpush1.bf16.msra.mxu0 0
    %131 = vmatprep.subr.bf16.mxu0 0
    %132 = vmatpush1.bf16.msra.mxu0 0
    %133 = vmatprep.subr.bf16.mxu0 0
    %134 = vmatpush1.bf16.msra.mxu0 0
    %135 = vmatprep.subr.bf16.mxu0 0
    %136 = vmatpush1.bf16.msra.mxu0 0
    %137 = vmatprep.subr.bf16.mxu0 0
    %138 = vmatpush1.bf16.msra.mxu0 0
    %139 = vmatprep.subr.bf16.mxu0 0
    %140 = vmatpush1.bf16.msra.mxu0 0
    %141 = vmatprep.subr.bf16.mxu0 0
    %142 = vmatpush1.bf16.msra.mxu0 0
    %143 = vmatprep.subr.bf16.mxu0 0
    %144 = vmatpush1.bf16.msra.mxu0 0
    %145 = vmatprep.subr.bf16.mxu0 0
    %146 = vmatpush1.bf16.msra.mxu0 0
    %147 = vmatprep.subr.bf16.mxu0 0
    %148 = vmatpush1.bf16.msra.mxu0 0
    %149 = vmatprep.subr.bf16.mxu0 0
    %150 = vmatpush1.bf16.msra.mxu0 0
    %151 = vmatprep.subr.bf16.mxu0 0
    %152 = vmatpush1.bf16.msra.mxu0 0
    %153 = vmatprep.subr.bf16.mxu0 0
    %154 = vmatpush1.bf16.msra.mxu0 0
    %155 = vmatprep.mubr.bf16.mxu0 0
    %156 = vmatmul.mubr.bf16.gmra.mrb[0].mxu0 %v121
    %v157 = vpop.f32.mrb[0].mxu0
    %v158 = vadd.f32 %v105, %v157
    %v159 = vpop.f32.mrb[0].mxu0
    %v160 = vpop.f32.mrb[0].mxu0
    %v161 = vadd.f32 %v105, %v160
    %v162 = vpop.f32.mrb[0].mxu0
    %163 = vdwg.mxu0
    %v164 = vld [vmem:[%s3] sm:$0xf]
    %v165 = vld [vmem:[%s3 + $0x4] sm:$0xf]
    %v166 = vld [vmem:[%s3 + $0x8] sm:$0xf]
    %v167 = vld [vmem:[%s3 + $0xc] sm:$0xf]
    %v168 = vld [vmem:[%s4] sm:$0x1]
    %v170 = vlaneseq
    %v171 = vshrl.u32 %v170, 7
    %v172 = vsub.s32 0, %v171
    %v173 = vrot.slane %v168, %v172
    %v179 = vunpack.c.l.b16 %v164
    %v180 = vunpack.c.l.b16 %v165
    %v181 = vunpack.c.l.b16 %v166
    %v182 = vunpack.c.l.b16 %v167
    %v183 = vpack.c.b16 %v180, %v179
    %v184 = vpack.c.b16 %v182, %v181
    %187 = vmatprep.subr.bf16.mxu0 0
    %188 = vmatpush1.bf16.msra.mxu0 %v183
    %189 = vmatprep.subr.bf16.mxu0 0
    %190 = vmatpush1.bf16.msra.mxu0 %v184
    %191 = vmatprep.subr.bf16.mxu0 0
    %192 = vmatpush1.bf16.msra.mxu0 0
    %193 = vmatprep.subr.bf16.mxu0 0
    %194 = vmatpush1.bf16.msra.mxu0 0
    %195 = vmatprep.subr.bf16.mxu0 0
    %196 = vmatpush1.bf16.msra.mxu0 0
    %197 = vmatprep.subr.bf16.mxu0 0
    %198 = vmatpush1.bf16.msra.mxu0 0
    %199 = vmatprep.subr.bf16.mxu0 0
    %200 = vmatpush1.bf16.msra.mxu0 0
    %201 = vmatprep.subr.bf16.mxu0 0
    %202 = vmatpush1.bf16.msra.mxu0 0
    %203 = vmatprep.subr.bf16.mxu0 0
    %204 = vmatpush1.bf16.msra.mxu0 0
    %205 = vmatprep.subr.bf16.mxu0 0
    %206 = vmatpush1.bf16.msra.mxu0 0
    %207 = vmatprep.subr.bf16.mxu0 0
    %208 = vmatpush1.bf16.msra.mxu0 0
    %209 = vmatprep.subr.bf16.mxu0 0
    %210 = vmatpush1.bf16.msra.mxu0 0
    %211 = vmatprep.subr.bf16.mxu0 0
    %212 = vmatpush1.bf16.msra.mxu0 0
    %213 = vmatprep.subr.bf16.mxu0 0
    %214 = vmatpush1.bf16.msra.mxu0 0
    %215 = vmatprep.subr.bf16.mxu0 0
    %216 = vmatpush1.bf16.msra.mxu0 0
    %217 = vmatprep.subr.bf16.mxu0 0
    %218 = vmatpush1.bf16.msra.mxu0 0
    %219 = vmatprep.mubr.bf16.mxu0 0
    %220 = vmatmul.mubr.bf16.gmra.mrb[0].mxu0 %v121
    %v221 = vpop.f32.mrb[0].mxu0
    %v222 = vadd.f32 %v173, %v221
    %v223 = vpop.f32.mrb[0].mxu0
    %v224 = vpop.f32.mrb[0].mxu0
    %v225 = vadd.f32 %v173, %v224
    %v226 = vpop.f32.mrb[0].mxu0
    %227 = vdwg.mxu0
    %v228 = vld [vmem:[%s5] sm:$0xf]
    %v229 = vld [vmem:[%s5 + $0x4] sm:$0xf]
    %v230 = vld [vmem:[%s5 + $0x8] sm:$0xf]
    %v231 = vld [vmem:[%s5 + $0xc] sm:$0xf]
    %v232 = vld [vmem:[#allocation2] sm:$0x1]
    %v234 = vlaneseq
    %v235 = vshrl.u32 %v234, 7
    %v236 = vsub.s32 0, %v235
    %v237 = vrot.slane %v232, %v236
    %v243 = vunpack.c.l.b16 %v228
    %v244 = vunpack.c.l.b16 %v229
    %v245 = vunpack.c.l.b16 %v230
    %v246 = vunpack.c.l.b16 %v231
    %v247 = vpack.c.b16 %v244, %v243
    %v248 = vpack.c.b16 %v246, %v245
    %251 = vmatprep.subr.bf16.mxu0 0
    %252 = vmatpush1.bf16.msra.mxu0 %v247
    %253 = vmatprep.subr.bf16.mxu0 0
    %254 = vmatpush1.bf16.msra.mxu0 %v248
    %255 = vmatprep.subr.bf16.mxu0 0
    %256 = vmatpush1.bf16.msra.mxu0 0
    %257 = vmatprep.subr.bf16.mxu0 0
    %258 = vmatpush1.bf16.msra.mxu0 0
    %259 = vmatprep.subr.bf16.mxu0 0
    %260 = vmatpush1.bf16.msra.mxu0 0
    %261 = vmatprep.subr.bf16.mxu0 0
    %262 = vmatpush1.bf16.msra.mxu0 0
    %263 = vmatprep.subr.bf16.mxu0 0
    %264 = vmatpush1.bf16.msra.mxu0 0
    %265 = vmatprep.subr.bf16.mxu0 0
    %266 = vmatpush1.bf16.msra.mxu0 0
    %267 = vmatprep.subr.bf16.mxu0 0
    %268 = vmatpush1.bf16.msra.mxu0 0
    %269 = vmatprep.subr.bf16.mxu0 0
    %270 = vmatpush1.bf16.msra.mxu0 0
    %271 = vmatprep.subr.bf16.mxu0 0
    %272 = vmatpush1.bf16.msra.mxu0 0
    %273 = vmatprep.subr.bf16.mxu0 0
    %274 = vmatpush1.bf16.msra.mxu0 0
    %275 = vmatprep.subr.bf16.mxu0 0
    %276 = vmatpush1.bf16.msra.mxu0 0
    %277 = vmatprep.subr.bf16.mxu0 0
    %278 = vmatpush1.bf16.msra.mxu0 0
    %279 = vmatprep.subr.bf16.mxu0 0
    %280 = vmatpush1.bf16.msra.mxu0 0
    %281 = vmatprep.subr.bf16.mxu0 0
    %282 = vmatpush1.bf16.msra.mxu0 0
    %283 = vmatprep.mubr.bf16.mxu0 0
    %284 = vmatmul.mubr.bf16.gmra.mrb[0].mxu0 %v121
    %v285 = vpop.f32.mrb[0].mxu0
    %v286 = vadd.f32 %v237, %v285
    %v287 = vpop.f32.mrb[0].mxu0
    %v288 = vpop.f32.mrb[0].mxu0
    %v289 = vadd.f32 %v237, %v288
    %v290 = vpop.f32.mrb[0].mxu0
    %291 = vdwg.mxu0
    %v292 = vmul.f32 %v158, 0.35355338
    %v293 = vmul.f32 %v161, 0.35355338
    %296 = vrot.lane.b32.xlu0 %v292, 120
    %v297 = vpop.permute.xlu0 %296
    %298 = vrot.lane.b32.xlu0 %v293, 120
    %v299 = vpop.permute.xlu0 %298
    %302 = vrot.lane.b32.xlu0 %v292, 112
    %v303 = vpop.permute.xlu0 %302
    %304 = vrot.lane.b32.xlu0 %v293, 112
    %v305 = vpop.permute.xlu0 %304
    %308 = vrot.lane.b32.xlu0 %v292, 104
    %v309 = vpop.permute.xlu0 %308
    %310 = vrot.lane.b32.xlu0 %v293, 104
    %v311 = vpop.permute.xlu0 %310
    %v314 = vpack.c.bf16 %v292, %v292
    %v315 = vpack.c.bf16 %v293, %v293
    %v316 = vpack.c.bf16 %v297, %v297
    %v317 = vpack.c.bf16 %v299, %v299
    %v318 = vpack.c.bf16 %v303, %v303
    %v319 = vpack.c.bf16 %v305, %v305
    %v320 = vpack.c.bf16 %v309, %v309
    %v321 = vpack.c.bf16 %v311, %v311
    %324 = vrot.lane.b32.xlu0 %v222, 120
    %v325 = vpop.permute.xlu0 %324
    %326 = vrot.lane.b32.xlu0 %v225, 120
    %v327 = vpop.permute.xlu0 %326
    %330 = vrot.lane.b32.xlu0 %v222, 112
    %v331 = vpop.permute.xlu0 %330
    %332 = vrot.lane.b32.xlu0 %v225, 112
    %v333 = vpop.permute.xlu0 %332
    %336 = vrot.lane.b32.xlu0 %v222, 104
    %v337 = vpop.permute.xlu0 %336
    %338 = vrot.lane.b32.xlu0 %v225, 104
    %v339 = vpop.permute.xlu0 %338
    %v342 = vpack.c.bf16 %v222, %v222
    %v343 = vpack.c.bf16 %v225, %v225
    %v344 = vpack.c.bf16 %v325, %v325
    %v345 = vpack.c.bf16 %v327, %v327
    %v346 = vpack.c.bf16 %v331, %v331
    %v347 = vpack.c.bf16 %v333, %v333
    %v348 = vpack.c.bf16 %v337, %v337
    %v349 = vpack.c.bf16 %v339, %v339
    %352 = vrot.lane.b32.xlu0 %v286, 120
    %v353 = vpop.permute.xlu0 %352
    %354 = vrot.lane.b32.xlu0 %v289, 120
    %v355 = vpop.permute.xlu0 %354
    %358 = vrot.lane.b32.xlu0 %v286, 112
    %v359 = vpop.permute.xlu0 %358
    %360 = vrot.lane.b32.xlu0 %v289, 112
    %v361 = vpop.permute.xlu0 %360
    %364 = vrot.lane.b32.xlu0 %v286, 104
    %v365 = vpop.permute.xlu0 %364
    %366 = vrot.lane.b32.xlu0 %v289, 104
    %v367 = vpop.permute.xlu0 %366
    %v370 = vpack.c.bf16 %v286, %v286
    %v371 = vpack.c.bf16 %v289, %v289
    %v372 = vpack.c.bf16 %v353, %v353
    %v373 = vpack.c.bf16 %v355, %v355
    %v374 = vpack.c.bf16 %v359, %v359
    %v375 = vpack.c.bf16 %v361, %v361
    %v376 = vpack.c.bf16 %v365, %v365
    %v377 = vpack.c.bf16 %v367, %v367
    %vm378 = vcmask 64512
    %v380 = vsel %vm378, %v314, 0
    %v383 = vsel %vm378, %v342, 0
    %385 = vmatprep.subr.bf16.mxu0 0
    %386 = vmatpush1.bf16.xpose.msra.mxu0 %v383
    %387 = vmatprep.subr.bf16.mxu0 0
    %388 = vmatpush1.bf16.xpose.msra.mxu0 0
    %389 = vmatprep.subr.bf16.mxu0 0
    %390 = vmatpush1.bf16.xpose.msra.mxu0 0
    %391 = vmatprep.subr.bf16.mxu0 0
    %392 = vmatpush1.bf16.xpose.msra.mxu0 0
    %393 = vmatprep.subr.bf16.mxu0 0
    %394 = vmatpush1.bf16.xpose.msra.mxu0 0
    %395 = vmatprep.subr.bf16.mxu0 0
    %396 = vmatpush1.bf16.xpose.msra.mxu0 0
    %397 = vmatprep.subr.bf16.mxu0 0
    %398 = vmatpush1.bf16.xpose.msra.mxu0 0
    %399 = vmatprep.subr.bf16.mxu0 0
    %400 = vmatpush1.bf16.xpose.msra.mxu0 0
    %401 = vmatprep.subr.bf16.mxu0 0
    %402 = vmatpush1.bf16.xpose.msra.mxu0 0
    %403 = vmatprep.subr.bf16.mxu0 0
    %404 = vmatpush1.bf16.xpose.msra.mxu0 0
    %405 = vmatprep.subr.bf16.mxu0 0
    %406 = vmatpush1.bf16.xpose.msra.mxu0 0
    %407 = vmatprep.subr.bf16.mxu0 0
    %408 = vmatpush1.bf16.xpose.msra.mxu0 0
    %409 = vmatprep.subr.bf16.mxu0 0
    %410 = vmatpush1.bf16.xpose.msra.mxu0 0
    %411 = vmatprep.subr.bf16.mxu0 0
    %412 = vmatpush1.bf16.xpose.msra.mxu0 0
    %413 = vmatprep.subr.bf16.mxu0 0
    %414 = vmatpush1.bf16.xpose.msra.mxu0 0
    %415 = vmatprep.subr.bf16.mxu0 0
    %416 = vmatpush1.bf16.xpose.msra.mxu0 0
    %417 = vmatprep.mubr.bf16.mxu0 0
    %418 = vmatmul.mubr.bf16.gmra.mrb[0].mxu0 %v380
    %v419 = vpop.f32.mrb[0].mxu0
    %v420 = vadd.f32 0.0, %v419
    %v421 = vpop.f32.mrb[0].mxu0
    %v422 = vpop.f32.mrb[0].mxu0
    %v423 = vpop.f32.mrb[0].mxu0
    %424 = vdwg.mxu0
    %v426 = vsel %vm378, %v315, 0
    %v429 = vsel %vm378, %v343, 0
    %431 = vmatprep.subr.bf16.mxu0 0
    %432 = vmatpush1.bf16.xpose.msra.mxu0 %v429
    %433 = vmatprep.subr.bf16.mxu0 0
    %434 = vmatpush1.bf16.xpose.msra.mxu0 0
    %435 = vmatprep.subr.bf16.mxu0 0
    %436 = vmatpush1.bf16.xpose.msra.mxu0 0
    %437 = vmatprep.subr.bf16.mxu0 0
    %438 = vmatpush1.bf16.xpose.msra.mxu0 0
    %439 = vmatprep.subr.bf16.mxu0 0
    %440 = vmatpush1.bf16.xpose.msra.mxu0 0
    %441 = vmatprep.subr.bf16.mxu0 0
    %442 = vmatpush1.bf16.xpose.msra.mxu0 0
    %443 = vmatprep.subr.bf16.mxu0 0
    %444 = vmatpush1.bf16.xpose.msra.mxu0 0
    %445 = vmatprep.subr.bf16.mxu0 0
    %446 = vmatpush1.bf16.xpose.msra.mxu0 0
    %447 = vmatprep.subr.bf16.mxu0 0
    %448 = vmatpush1.bf16.xpose.msra.mxu0 0
    %449 = vmatprep.subr.bf16.mxu0 0
    %450 = vmatpush1.bf16.xpose.msra.mxu0 0
    %451 = vmatprep.subr.bf16.mxu0 0
    %452 = vmatpush1.bf16.xpose.msra.mxu0 0
    %453 = vmatprep.subr.bf16.mxu0 0
    %454 = vmatpush1.bf16.xpose.msra.mxu0 0
    %455 = vmatprep.subr.bf16.mxu0 0
    %456 = vmatpush1.bf16.xpose.msra.mxu0 0
    %457 = vmatprep.subr.bf16.mxu0 0
    %458 = vmatpush1.bf16.xpose.msra.mxu0 0
    %459 = vmatprep.subr.bf16.mxu0 0
    %460 = vmatpush1.bf16.xpose.msra.mxu0 0
    %461 = vmatprep.subr.bf16.mxu0 0
    %462 = vmatpush1.bf16.xpose.msra.mxu0 0
    %463 = vmatprep.mubr.bf16.mxu0 0
    %464 = vmatmul.mubr.bf16.gmra.mrb[0].mxu0 %v426
    %v465 = vpop.f32.mrb[0].mxu0
    %v466 = vadd.f32 0.0, %v465
    %v467 = vpop.f32.mrb[0].mxu0
    %v468 = vpop.f32.mrb[0].mxu0
    %v469 = vpop.f32.mrb[0].mxu0
    %470 = vdwg.mxu0
    %v472 = vsel %vm378, %v316, 0
    %v475 = vsel %vm378, %v344, 0
    %477 = vmatprep.subr.bf16.mxu0 0
    %478 = vmatpush1.bf16.xpose.msra.mxu0 %v475
    %479 = vmatprep.subr.bf16.mxu0 0
    %480 = vmatpush1.bf16.xpose.msra.mxu0 0
    %481 = vmatprep.subr.bf16.mxu0 0
    %482 = vmatpush1.bf16.xpose.msra.mxu0 0
    %483 = vmatprep.subr.bf16.mxu0 0
    %484 = vmatpush1.bf16.xpose.msra.mxu0 0
    %485 = vmatprep.subr.bf16.mxu0 0
    %486 = vmatpush1.bf16.xpose.msra.mxu0 0
    %487 = vmatprep.subr.bf16.mxu0 0
    %488 = vmatpush1.bf16.xpose.msra.mxu0 0
    %489 = vmatprep.subr.bf16.mxu0 0
    %490 = vmatpush1.bf16.xpose.msra.mxu0 0
    %491 = vmatprep.subr.bf16.mxu0 0
    %492 = vmatpush1.bf16.xpose.msra.mxu0 0
    %493 = vmatprep.subr.bf16.mxu0 0
    %494 = vmatpush1.bf16.xpose.msra.mxu0 0
    %495 = vmatprep.subr.bf16.mxu0 0
    %496 = vmatpush1.bf16.xpose.msra.mxu0 0
    %497 = vmatprep.subr.bf16.mxu0 0
    %498 = vmatpush1.bf16.xpose.msra.mxu0 0
    %499 = vmatprep.subr.bf16.mxu0 0
    %500 = vmatpush1.bf16.xpose.msra.mxu0 0
    %501 = vmatprep.subr.bf16.mxu0 0
    %502 = vmatpush1.bf16.xpose.msra.mxu0 0
    %503 = vmatprep.subr.bf16.mxu0 0
    %504 = vmatpush1.bf16.xpose.msra.mxu0 0
    %505 = vmatprep.subr.bf16.mxu0 0
    %506 = vmatpush1.bf16.xpose.msra.mxu0 0
    %507 = vmatprep.subr.bf16.mxu0 0
    %508 = vmatpush1.bf16.xpose.msra.mxu0 0
    %509 = vmatprep.mubr.bf16.mxu0 0
    %510 = vmatmul.mubr.bf16.gmra.mrb[0].mxu0 %v472
    %v511 = vpop.f32.mrb[0].mxu0
    %v512 = vadd.f32 0.0, %v511
    %v513 = vpop.f32.mrb[0].mxu0
    %v514 = vpop.f32.mrb[0].mxu0
    %v515 = vpop.f32.mrb[0].mxu0
    %516 = vdwg.mxu0
    %v518 = vsel %vm378, %v317, 0
    %v521 = vsel %vm378, %v345, 0
    %523 = vmatprep.subr.bf16.mxu0 0
    %524 = vmatpush1.bf16.xpose.msra.mxu0 %v521
    %525 = vmatprep.subr.bf16.mxu0 0
    %526 = vmatpush1.bf16.xpose.msra.mxu0 0
    %527 = vmatprep.subr.bf16.mxu0 0
    %528 = vmatpush1.bf16.xpose.msra.mxu0 0
    %529 = vmatprep.subr.bf16.mxu0 0
    %530 = vmatpush1.bf16.xpose.msra.mxu0 0
    %531 = vmatprep.subr.bf16.mxu0 0
    %532 = vmatpush1.bf16.xpose.msra.mxu0 0
    %533 = vmatprep.subr.bf16.mxu0 0
    %534 = vmatpush1.bf16.xpose.msra.mxu0 0
    %535 = vmatprep.subr.bf16.mxu0 0
    %536 = vmatpush1.bf16.xpose.msra.mxu0 0
    %537 = vmatprep.subr.bf16.mxu0 0
    %538 = vmatpush1.bf16.xpose.msra.mxu0 0
    %539 = vmatprep.subr.bf16.mxu0 0
    %540 = vmatpush1.bf16.xpose.msra.mxu0 0
    %541 = vmatprep.subr.bf16.mxu0 0
    %542 = vmatpush1.bf16.xpose.msra.mxu0 0
    %543 = vmatprep.subr.bf16.mxu0 0
    %544 = vmatpush1.bf16.xpose.msra.mxu0 0
    %545 = vmatprep.subr.bf16.mxu0 0
    %546 = vmatpush1.bf16.xpose.msra.mxu0 0
    %547 = vmatprep.subr.bf16.mxu0 0
    %548 = vmatpush1.bf16.xpose.msra.mxu0 0
    %549 = vmatprep.subr.bf16.mxu0 0
    %550 = vmatpush1.bf16.xpose.msra.mxu0 0
    %551 = vmatprep.subr.bf16.mxu0 0
    %552 = vmatpush1.bf16.xpose.msra.mxu0 0
    %553 = vmatprep.subr.bf16.mxu0 0
    %554 = vmatpush1.bf16.xpose.msra.mxu0 0
    %555 = vmatprep.mubr.bf16.mxu0 0
    %556 = vmatmul.mubr.bf16.gmra.mrb[0].mxu0 %v518
    %v557 = vpop.f32.mrb[0].mxu0
    %v558 = vadd.f32 0.0, %v557
    %v559 = vpop.f32.mrb[0].mxu0
    %v560 = vpop.f32.mrb[0].mxu0
    %v561 = vpop.f32.mrb[0].mxu0
    %562 = vdwg.mxu0
    %v564 = vsel %vm378, %v318, 0
    %v567 = vsel %vm378, %v346, 0
    %569 = vmatprep.subr.bf16.mxu0 0
    %570 = vmatpush1.bf16.xpose.msra.mxu0 %v567
    %571 = vmatprep.subr.bf16.mxu0 0
    %572 = vmatpush1.bf16.xpose.msra.mxu0 0
    %573 = vmatprep.subr.bf16.mxu0 0
    %574 = vmatpush1.bf16.xpose.msra.mxu0 0
    %575 = vmatprep.subr.bf16.mxu0 0
    %576 = vmatpush1.bf16.xpose.msra.mxu0 0
    %577 = vmatprep.subr.bf16.mxu0 0
    %578 = vmatpush1.bf16.xpose.msra.mxu0 0
    %579 = vmatprep.subr.bf16.mxu0 0
    %580 = vmatpush1.bf16.xpose.msra.mxu0 0
    %581 = vmatprep.subr.bf16.mxu0 0
    %582 = vmatpush1.bf16.xpose.msra.mxu0 0
    %583 = vmatprep.subr.bf16.mxu0 0
    %584 = vmatpush1.bf16.xpose.msra.mxu0 0
    %585 = vmatprep.subr.bf16.mxu0 0
    %586 = vmatpush1.bf16.xpose.msra.mxu0 0
    %587 = vmatprep.subr.bf16.mxu0 0
    %588 = vmatpush1.bf16.xpose.msra.mxu0 0
    %589 = vmatprep.subr.bf16.mxu0 0
    %590 = vmatpush1.bf16.xpose.msra.mxu0 0
    %591 = vmatprep.subr.bf16.mxu0 0
    %592 = vmatpush1.bf16.xpose.msra.mxu0 0
    %593 = vmatprep.subr.bf16.mxu0 0
    %594 = vmatpush1.bf16.xpose.msra.mxu0 0
    %595 = vmatprep.subr.bf16.mxu0 0
    %596 = vmatpush1.bf16.xpose.msra.mxu0 0
    %597 = vmatprep.subr.bf16.mxu0 0
    %598 = vmatpush1.bf16.xpose.msra.mxu0 0
    %599 = vmatprep.subr.bf16.mxu0 0
    %600 = vmatpush1.bf16.xpose.msra.mxu0 0
    %601 = vmatprep.mubr.bf16.mxu0 0
    %602 = vmatmul.mubr.bf16.gmra.mrb[0].mxu0 %v564
    %v603 = vpop.f32.mrb[0].mxu0
    %v604 = vadd.f32 0.0, %v603
    %v605 = vpop.f32.mrb[0].mxu0
    %v606 = vpop.f32.mrb[0].mxu0
    %v607 = vpop.f32.mrb[0].mxu0
    %608 = vdwg.mxu0
    %v610 = vsel %vm378, %v319, 0
    %v613 = vsel %vm378, %v347, 0
    %615 = vmatprep.subr.bf16.mxu0 0
    %616 = vmatpush1.bf16.xpose.msra.mxu0 %v613
    %617 = vmatprep.subr.bf16.mxu0 0
    %618 = vmatpush1.bf16.xpose.msra.mxu0 0
    %619 = vmatprep.subr.bf16.mxu0 0
    %620 = vmatpush1.bf16.xpose.msra.mxu0 0
    %621 = vmatprep.subr.bf16.mxu0 0
    %622 = vmatpush1.bf16.xpose.msra.mxu0 0
    %623 = vmatprep.subr.bf16.mxu0 0
    %624 = vmatpush1.bf16.xpose.msra.mxu0 0
    %625 = vmatprep.subr.bf16.mxu0 0
    %626 = vmatpush1.bf16.xpose.msra.mxu0 0
    %627 = vmatprep.subr.bf16.mxu0 0
    %628 = vmatpush1.bf16.xpose.msra.mxu0 0
    %629 = vmatprep.subr.bf16.mxu0 0
    %630 = vmatpush1.bf16.xpose.msra.mxu0 0
    %631 = vmatprep.subr.bf16.mxu0 0
    %632 = vmatpush1.bf16.xpose.msra.mxu0 0
    %633 = vmatprep.subr.bf16.mxu0 0
    %634 = vmatpush1.bf16.xpose.msra.mxu0 0
    %635 = vmatprep.subr.bf16.mxu0 0
    %636 = vmatpush1.bf16.xpose.msra.mxu0 0
    %637 = vmatprep.subr.bf16.mxu0 0
    %638 = vmatpush1.bf16.xpose.msra.mxu0 0
    %639 = vmatprep.subr.bf16.mxu0 0
    %640 = vmatpush1.bf16.xpose.msra.mxu0 0
    %641 = vmatprep.subr.bf16.mxu0 0
    %642 = vmatpush1.bf16.xpose.msra.mxu0 0
    %643 = vmatprep.subr.bf16.mxu0 0
    %644 = vmatpush1.bf16.xpose.msra.mxu0 0
    %645 = vmatprep.subr.bf16.mxu0 0
    %646 = vmatpush1.bf16.xpose.msra.mxu0 0
    %647 = vmatprep.mubr.bf16.mxu0 0
    %648 = vmatmul.mubr.bf16.gmra.mrb[0].mxu0 %v610
    %v649 = vpop.f32.mrb[0].mxu0
    %v650 = vadd.f32 0.0, %v649
    %v651 = vpop.f32.mrb[0].mxu0
    %v652 = vpop.f32.mrb[0].mxu0
    %v653 = vpop.f32.mrb[0].mxu0
    %654 = vdwg.mxu0
    %v656 = vsel %vm378, %v320, 0
    %v659 = vsel %vm378, %v348, 0
    %661 = vmatprep.subr.bf16.mxu0 0
    %662 = vmatpush1.bf16.xpose.msra.mxu0 %v659
    %663 = vmatprep.subr.bf16.mxu0 0
    %664 = vmatpush1.bf16.xpose.msra.mxu0 0
    %665 = vmatprep.subr.bf16.mxu0 0
    %666 = vmatpush1.bf16.xpose.msra.mxu0 0
    %667 = vmatprep.subr.bf16.mxu0 0
    %668 = vmatpush1.bf16.xpose.msra.mxu0 0
    %669 = vmatprep.subr.bf16.mxu0 0
    %670 = vmatpush1.bf16.xpose.msra.mxu0 0
    %671 = vmatprep.subr.bf16.mxu0 0
    %672 = vmatpush1.bf16.xpose.msra.mxu0 0
    %673 = vmatprep.subr.bf16.mxu0 0
    %674 = vmatpush1.bf16.xpose.msra.mxu0 0
    %675 = vmatprep.subr.bf16.mxu0 0
    %676 = vmatpush1.bf16.xpose.msra.mxu0 0
    %677 = vmatprep.subr.bf16.mxu0 0
    %678 = vmatpush1.bf16.xpose.msra.mxu0 0
    %679 = vmatprep.subr.bf16.mxu0 0
    %680 = vmatpush1.bf16.xpose.msra.mxu0 0
    %681 = vmatprep.subr.bf16.mxu0 0
    %682 = vmatpush1.bf16.xpose.msra.mxu0 0
    %683 = vmatprep.subr.bf16.mxu0 0
    %684 = vmatpush1.bf16.xpose.msra.mxu0 0
    %685 = vmatprep.subr.bf16.mxu0 0
    %686 = vmatpush1.bf16.xpose.msra.mxu0 0
    %687 = vmatprep.subr.bf16.mxu0 0
    %688 = vmatpush1.bf16.xpose.msra.mxu0 0
    %689 = vmatprep.subr.bf16.mxu0 0
    %690 = vmatpush1.bf16.xpose.msra.mxu0 0
    %691 = vmatprep.subr.bf16.mxu0 0
    %692 = vmatpush1.bf16.xpose.msra.mxu0 0
    %693 = vmatprep.mubr.bf16.mxu0 0
    %694 = vmatmul.mubr.bf16.gmra.mrb[0].mxu0 %v656
    %v695 = vpop.f32.mrb[0].mxu0
    %v696 = vadd.f32 0.0, %v695
    %v697 = vpop.f32.mrb[0].mxu0
    %v698 = vpop.f32.mrb[0].mxu0
    %v699 = vpop.f32.mrb[0].mxu0
    %700 = vdwg.mxu0
    %v702 = vsel %vm378, %v321, 0
    %v705 = vsel %vm378, %v349, 0
    %707 = vmatprep.subr.bf16.mxu0 0
    %708 = vmatpush1.bf16.xpose.msra.mxu0 %v705
    %709 = vmatprep.subr.bf16.mxu0 0
    %710 = vmatpush1.bf16.xpose.msra.mxu0 0
    %711 = vmatprep.subr.bf16.mxu0 0
    %712 = vmatpush1.bf16.xpose.msra.mxu0 0
    %713 = vmatprep.subr.bf16.mxu0 0
    %714 = vmatpush1.bf16.xpose.msra.mxu0 0
    %715 = vmatprep.subr.bf16.mxu0 0
    %716 = vmatpush1.bf16.xpose.msra.mxu0 0
    %717 = vmatprep.subr.bf16.mxu0 0
    %718 = vmatpush1.bf16.xpose.msra.mxu0 0
    %719 = vmatprep.subr.bf16.mxu0 0
    %720 = vmatpush1.bf16.xpose.msra.mxu0 0
    %721 = vmatprep.subr.bf16.mxu0 0
    %722 = vmatpush1.bf16.xpose.msra.mxu0 0
    %723 = vmatprep.subr.bf16.mxu0 0
    %724 = vmatpush1.bf16.xpose.msra.mxu0 0
    %725 = vmatprep.subr.bf16.mxu0 0
    %726 = vmatpush1.bf16.xpose.msra.mxu0 0
    %727 = vmatprep.subr.bf16.mxu0 0
    %728 = vmatpush1.bf16.xpose.msra.mxu0 0
    %729 = vmatprep.subr.bf16.mxu0 0
    %730 = vmatpush1.bf16.xpose.msra.mxu0 0
    %731 = vmatprep.subr.bf16.mxu0 0
    %732 = vmatpush1.bf16.xpose.msra.mxu0 0
    %733 = vmatprep.subr.bf16.mxu0 0
    %734 = vmatpush1.bf16.xpose.msra.mxu0 0
    %735 = vmatprep.subr.bf16.mxu0 0
    %736 = vmatpush1.bf16.xpose.msra.mxu0 0
    %737 = vmatprep.subr.bf16.mxu0 0
    %738 = vmatpush1.bf16.xpose.msra.mxu0 0
    %739 = vmatprep.mubr.bf16.mxu0 0
    %740 = vmatmul.mubr.bf16.gmra.mrb[0].mxu0 %v702
    %v741 = vpop.f32.mrb[0].mxu0
    %v742 = vadd.f32 0.0, %v741
    %v743 = vpop.f32.mrb[0].mxu0
    %v744 = vpop.f32.mrb[0].mxu0
    %v745 = vpop.f32.mrb[0].mxu0
    %746 = vdwg.mxu0
    %v747 = vsel %vm378, %v420, -inf
    %748 = vmax.xlane.f32.xlu0 %v747
    %v749 = vpop.xlane.xlu0 %748
    %v750 = vsel %vm378, %v466, -inf
    %751 = vmax.xlane.f32.xlu0 %v750
    %v752 = vpop.xlane.xlu0 %751
    %v753 = vsel %vm378, %v512, -inf
    %754 = vmax.xlane.f32.xlu0 %v753
    %v755 = vpop.xlane.xlu0 %754
    %v756 = vsel %vm378, %v558, -inf
    %757 = vmax.xlane.f32.xlu0 %v756
    %v758 = vpop.xlane.xlu0 %757
    %v759 = vsel %vm378, %v604, -inf
    %760 = vmax.xlane.f32.xlu0 %v759
    %v761 = vpop.xlane.xlu0 %760
    %v762 = vsel %vm378, %v650, -inf
    %763 = vmax.xlane.f32.xlu0 %v762
    %v764 = vpop.xlane.xlu0 %763
    %v765 = vsel %vm378, %v696, -inf
    %766 = vmax.xlane.f32.xlu0 %v765
    %v767 = vpop.xlane.xlu0 %766
    %v768 = vsel %vm378, %v742, -inf
    %769 = vmax.xlane.f32.xlu0 %v768
    %v770 = vpop.xlane.xlu0 %769
    %v771 = vsub.f32 %v420, %v749
    %v772 = vsub.f32 %v466, %v752
    %v773 = vsub.f32 %v512, %v755
    %v774 = vsub.f32 %v558, %v758
    %v775 = vsub.f32 %v604, %v761
    %v776 = vsub.f32 %v650, %v764
    %v777 = vsub.f32 %v696, %v767
    %v778 = vsub.f32 %v742, %v770
    %v779 = vmul.f32 %v771, 1.442695
    %v780 = vpow.pop %v779
    %v781 = vmul.f32 %v772, 1.442695
    %v782 = vpow.pop %v781
    %v783 = vmul.f32 %v773, 1.442695
    %v784 = vpow.pop %v783
    %v785 = vmul.f32 %v774, 1.442695
    %v786 = vpow.pop %v785
    %v787 = vmul.f32 %v775, 1.442695
    %v788 = vpow.pop %v787
    %v789 = vmul.f32 %v776, 1.442695
    %v790 = vpow.pop %v789
    %v791 = vmul.f32 %v777, 1.442695
    %v792 = vpow.pop %v791
    %v793 = vmul.f32 %v778, 1.442695
    %v794 = vpow.pop %v793
    %v795 = vsel %vm378, %v780, 0.0
    %796 = vadd.xlane.f32.xlu0 %v795
    %v797 = vpop.xlane.xlu0 %796
    %v798 = vsel %vm378, %v782, 0.0
    %799 = vadd.xlane.f32.xlu0 %v798
    %v800 = vpop.xlane.xlu0 %799
    %v801 = vsel %vm378, %v784, 0.0
    %802 = vadd.xlane.f32.xlu0 %v801
    %v803 = vpop.xlane.xlu0 %802
    %v804 = vsel %vm378, %v786, 0.0
    %805 = vadd.xlane.f32.xlu0 %v804
    %v806 = vpop.xlane.xlu0 %805
    %v807 = vsel %vm378, %v788, 0.0
    %808 = vadd.xlane.f32.xlu0 %v807
    %v809 = vpop.xlane.xlu0 %808
    %v810 = vsel %vm378, %v790, 0.0
    %811 = vadd.xlane.f32.xlu0 %v810
    %v812 = vpop.xlane.xlu0 %811
    %v813 = vsel %vm378, %v792, 0.0
    %814 = vadd.xlane.f32.xlu0 %v813
    %v815 = vpop.xlane.xlu0 %814
    %v816 = vsel %vm378, %v794, 0.0
    %817 = vadd.xlane.f32.xlu0 %v816
    %v818 = vpop.xlane.xlu0 %817
    %v819 = vrcp.pop %v797
    %v820 = vrcp.pop %v800
    %v821 = vrcp.pop %v803
    %v822 = vrcp.pop %v806
    %v823 = vrcp.pop %v809
    %v824 = vrcp.pop %v812
    %v825 = vrcp.pop %v815
    %v826 = vrcp.pop %v818
    %v827 = vmul.f32 %v780, %v819
    %v828 = vmul.f32 %v782, %v820
    %v829 = vmul.f32 %v784, %v821
    %v830 = vmul.f32 %v786, %v822
    %v831 = vmul.f32 %v788, %v823
    %v832 = vmul.f32 %v790, %v824
    %v833 = vmul.f32 %v792, %v825
    %v834 = vmul.f32 %v794, %v826
    %v835 = vpack.c.bf16 %v827, %v827
    %v836 = vpack.c.bf16 %v828, %v828
    %v837 = vpack.c.bf16 %v829, %v829
    %v838 = vpack.c.bf16 %v830, %v830
    %v839 = vpack.c.bf16 %v831, %v831
    %v840 = vpack.c.bf16 %v832, %v832
    %v841 = vpack.c.bf16 %v833, %v833
    %v842 = vpack.c.bf16 %v834, %v834
    %v844 = vsel %vm378, %v835, 0
    %vm846 = vcmask 1043456
    %v848 = vsel %vm846, %v370, 0
    %850 = vmatprep.subr.bf16.mxu0 0
    %851 = vmatpush1.bf16.msra.mxu0 %v848
    %852 = vmatprep.subr.bf16.mxu0 0
    %853 = vmatpush1.bf16.msra.mxu0 0
    %854 = vmatprep.subr.bf16.mxu0 0
    %855 = vmatpush1.bf16.msra.mxu0 0
    %856 = vmatprep.subr.bf16.mxu0 0
    %857 = vmatpush1.bf16.msra.mxu0 0
    %858 = vmatprep.subr.bf16.mxu0 0
    %859 = vmatpush1.bf16.msra.mxu0 0
    %860 = vmatprep.subr.bf16.mxu0 0
    %861 = vmatpush1.bf16.msra.mxu0 0
    %862 = vmatprep.subr.bf16.mxu0 0
    %863 = vmatpush1.bf16.msra.mxu0 0
    %864 = vmatprep.subr.bf16.mxu0 0
    %865 = vmatpush1.bf16.msra.mxu0 0
    %866 = vmatprep.subr.bf16.mxu0 0
    %867 = vmatpush1.bf16.msra.mxu0 0
    %868 = vmatprep.subr.bf16.mxu0 0
    %869 = vmatpush1.bf16.msra.mxu0 0
    %870 = vmatprep.subr.bf16.mxu0 0
    %871 = vmatpush1.bf16.msra.mxu0 0
    %872 = vmatprep.subr.bf16.mxu0 0
    %873 = vmatpush1.bf16.msra.mxu0 0
    %874 = vmatprep.subr.bf16.mxu0 0
    %875 = vmatpush1.bf16.msra.mxu0 0
    %876 = vmatprep.subr.bf16.mxu0 0
    %877 = vmatpush1.bf16.msra.mxu0 0
    %878 = vmatprep.subr.bf16.mxu0 0
    %879 = vmatpush1.bf16.msra.mxu0 0
    %880 = vmatprep.subr.bf16.mxu0 0
    %881 = vmatpush1.bf16.msra.mxu0 0
    %882 = vmatprep.mubr.bf16.mxu0 0
    %883 = vmatmul.mubr.bf16.gmra.mrb[0].mxu0 %v844
    %v884 = vpop.f32.mrb[0].mxu0
    %v885 = vadd.f32 0.0, %v884
    %v886 = vpop.f32.mrb[0].mxu0
    %v887 = vpop.f32.mrb[0].mxu0
    %v888 = vpop.f32.mrb[0].mxu0
    %889 = vdwg.mxu0
    %v891 = vsel %vm378, %v836, 0
    %v894 = vsel %vm846, %v371, 0
    %896 = vmatprep.subr.bf16.mxu0 0
    %897 = vmatpush1.bf16.msra.mxu0 %v894
    %898 = vmatprep.subr.bf16.mxu0 0
    %899 = vmatpush1.bf16.msra.mxu0 0
    %900 = vmatprep.subr.bf16.mxu0 0
    %901 = vmatpush1.bf16.msra.mxu0 0
    %902 = vmatprep.subr.bf16.mxu0 0
    %903 = vmatpush1.bf16.msra.mxu0 0
    %904 = vmatprep.subr.bf16.mxu0 0
    %905 = vmatpush1.bf16.msra.mxu0 0
    %906 = vmatprep.subr.bf16.mxu0 0
    %907 = vmatpush1.bf16.msra.mxu0 0
    %908 = vmatprep.subr.bf16.mxu0 0
    %909 = vmatpush1.bf16.msra.mxu0 0
    %910 = vmatprep.subr.bf16.mxu0 0
    %911 = vmatpush1.bf16.msra.mxu0 0
    %912 = vmatprep.subr.bf16.mxu0 0
    %913 = vmatpush1.bf16.msra.mxu0 0
    %914 = vmatprep.subr.bf16.mxu0 0
    %915 = vmatpush1.bf16.msra.mxu0 0
    %916 = vmatprep.subr.bf16.mxu0 0
    %917 = vmatpush1.bf16.msra.mxu0 0
    %918 = vmatprep.subr.bf16.mxu0 0
    %919 = vmatpush1.bf16.msra.mxu0 0
    %920 = vmatprep.subr.bf16.mxu0 0
    %921 = vmatpush1.bf16.msra.mxu0 0
    %922 = vmatprep.subr.bf16.mxu0 0
    %923 = vmatpush1.bf16.msra.mxu0 0
    %924 = vmatprep.subr.bf16.mxu0 0
    %925 = vmatpush1.bf16.msra.mxu0 0
    %926 = vmatprep.subr.bf16.mxu0 0
    %927 = vmatpush1.bf16.msra.mxu0 0
    %928 = vmatprep.mubr.bf16.mxu0 0
    %929 = vmatmul.mubr.bf16.gmra.mrb[0].mxu0 %v891
    %v930 = vpop.f32.mrb[0].mxu0
    %v931 = vadd.f32 0.0, %v930
    %v932 = vpop.f32.mrb[0].mxu0
    %v933 = vpop.f32.mrb[0].mxu0
    %v934 = vpop.f32.mrb[0].mxu0
    %935 = vdwg.mxu0
    %v937 = vsel %vm378, %v837, 0
    %v940 = vsel %vm846, %v372, 0
    %942 = vmatprep.subr.bf16.mxu0 0
    %943 = vmatpush1.bf16.msra.mxu0 %v940
    %944 = vmatprep.subr.bf16.mxu0 0
    %945 = vmatpush1.bf16.msra.mxu0 0
    %946 = vmatprep.subr.bf16.mxu0 0
    %947 = vmatpush1.bf16.msra.mxu0 0
    %948 = vmatprep.subr.bf16.mxu0 0
    %949 = vmatpush1.bf16.msra.mxu0 0
    %950 = vmatprep.subr.bf16.mxu0 0
    %951 = vmatpush1.bf16.msra.mxu0 0
    %952 = vmatprep.subr.bf16.mxu0 0
    %953 = vmatpush1.bf16.msra.mxu0 0
    %954 = vmatprep.subr.bf16.mxu0 0
    %955 = vmatpush1.bf16.msra.mxu0 0
    %956 = vmatprep.subr.bf16.mxu0 0
    %957 = vmatpush1.bf16.msra.mxu0 0
    %958 = vmatprep.subr.bf16.mxu0 0
    %959 = vmatpush1.bf16.msra.mxu0 0
    %960 = vmatprep.subr.bf16.mxu0 0
    %961 = vmatpush1.bf16.msra.mxu0 0
    %962 = vmatprep.subr.bf16.mxu0 0
    %963 = vmatpush1.bf16.msra.mxu0 0
    %964 = vmatprep.subr.bf16.mxu0 0
    %965 = vmatpush1.bf16.msra.mxu0 0
    %966 = vmatprep.subr.bf16.mxu0 0
    %967 = vmatpush1.bf16.msra.mxu0 0
    %968 = vmatprep.subr.bf16.mxu0 0
    %969 = vmatpush1.bf16.msra.mxu0 0
    %970 = vmatprep.subr.bf16.mxu0 0
    %971 = vmatpush1.bf16.msra.mxu0 0
    %972 = vmatprep.subr.bf16.mxu0 0
    %973 = vmatpush1.bf16.msra.mxu0 0
    %974 = vmatprep.mubr.bf16.mxu0 0
    %975 = vmatmul.mubr.bf16.gmra.mrb[0].mxu0 %v937
    %v976 = vpop.f32.mrb[0].mxu0
    %v977 = vadd.f32 0.0, %v976
    %v978 = vpop.f32.mrb[0].mxu0
    %v979 = vpop.f32.mrb[0].mxu0
    %v980 = vpop.f32.mrb[0].mxu0
    %981 = vdwg.mxu0
    %v983 = vsel %vm378, %v838, 0
    %v986 = vsel %vm846, %v373, 0
    %988 = vmatprep.subr.bf16.mxu0 0
    %989 = vmatpush1.bf16.msra.mxu0 %v986
    %990 = vmatprep.subr.bf16.mxu0 0
    %991 = vmatpush1.bf16.msra.mxu0 0
    %992 = vmatprep.subr.bf16.mxu0 0
    %993 = vmatpush1.bf16.msra.mxu0 0
    %994 = vmatprep.subr.bf16.mxu0 0
    %995 = vmatpush1.bf16.msra.mxu0 0
    %996 = vmatprep.subr.bf16.mxu0 0
    %997 = vmatpush1.bf16.msra.mxu0 0
    %998 = vmatprep.subr.bf16.mxu0 0
    %999 = vmatpush1.bf16.msra.mxu0 0
    %1000 = vmatprep.subr.bf16.mxu0 0
    %1001 = vmatpush1.bf16.msra.mxu0 0
    %1002 = vmatprep.subr.bf16.mxu0 0
    %1003 = vmatpush1.bf16.msra.mxu0 0
    %1004 = vmatprep.subr.bf16.mxu0 0
    %1005 = vmatpush1.bf16.msra.mxu0 0
    %1006 = vmatprep.subr.bf16.mxu0 0
    %1007 = vmatpush1.bf16.msra.mxu0 0
    %1008 = vmatprep.subr.bf16.mxu0 0
    %1009 = vmatpush1.bf16.msra.mxu0 0
    %1010 = vmatprep.subr.bf16.mxu0 0
    %1011 = vmatpush1.bf16.msra.mxu0 0
    %1012 = vmatprep.subr.bf16.mxu0 0
    %1013 = vmatpush1.bf16.msra.mxu0 0
    %1014 = vmatprep.subr.bf16.mxu0 0
    %1015 = vmatpush1.bf16.msra.mxu0 0
    %1016 = vmatprep.subr.bf16.mxu0 0
    %1017 = vmatpush1.bf16.msra.mxu0 0
    %1018 = vmatprep.subr.bf16.mxu0 0
    %1019 = vmatpush1.bf16.msra.mxu0 0
    %1020 = vmatprep.mubr.bf16.mxu0 0
    %1021 = vmatmul.mubr.bf16.gmra.mrb[0].mxu0 %v983
    %v1022 = vpop.f32.mrb[0].mxu0
    %v1023 = vadd.f32 0.0, %v1022
    %v1024 = vpop.f32.mrb[0].mxu0
    %v1025 = vpop.f32.mrb[0].mxu0
    %v1026 = vpop.f32.mrb[0].mxu0
    %1027 = vdwg.mxu0
    %v1029 = vsel %vm378, %v839, 0
    %v1032 = vsel %vm846, %v374, 0
    %1034 = vmatprep.subr.bf16.mxu0 0
    %1035 = vmatpush1.bf16.msra.mxu0 %v1032
    %1036 = vmatprep.subr.bf16.mxu0 0
    %1037 = vmatpush1.bf16.msra.mxu0 0
    %1038 = vmatprep.subr.bf16.mxu0 0
    %1039 = vmatpush1.bf16.msra.mxu0 0
    %1040 = vmatprep.subr.bf16.mxu0 0
    %1041 = vmatpush1.bf16.msra.mxu0 0
    %1042 = vmatprep.subr.bf16.mxu0 0
    %1043 = vmatpush1.bf16.msra.mxu0 0
    %1044 = vmatprep.subr.bf16.mxu0 0
    %1045 = vmatpush1.bf16.msra.mxu0 0
    %1046 = vmatprep.subr.bf16.mxu0 0
    %1047 = vmatpush1.bf16.msra.mxu0 0
    %1048 = vmatprep.subr.bf16.mxu0 0
    %1049 = vmatpush1.bf16.msra.mxu0 0
    %1050 = vmatprep.subr.bf16.mxu0 0
    %1051 = vmatpush1.bf16.msra.mxu0 0
    %1052 = vmatprep.subr.bf16.mxu0 0
    %1053 = vmatpush1.bf16.msra.mxu0 0
    %1054 = vmatprep.subr.bf16.mxu0 0
    %1055 = vmatpush1.bf16.msra.mxu0 0
    %1056 = vmatprep.subr.bf16.mxu0 0
    %1057 = vmatpush1.bf16.msra.mxu0 0
    %1058 = vmatprep.subr.bf16.mxu0 0
    %1059 = vmatpush1.bf16.msra.mxu0 0
    %1060 = vmatprep.subr.bf16.mxu0 0
    %1061 = vmatpush1.bf16.msra.mxu0 0
    %1062 = vmatprep.subr.bf16.mxu0 0
    %1063 = vmatpush1.bf16.msra.mxu0 0
    %1064 = vmatprep.subr.bf16.mxu0 0
    %1065 = vmatpush1.bf16.msra.mxu0 0
    %1066 = vmatprep.mubr.bf16.mxu0 0
    %1067 = vmatmul.mubr.bf16.gmra.mrb[0].mxu0 %v1029
    %v1068 = vpop.f32.mrb[0].mxu0
    %v1069 = vadd.f32 0.0, %v1068
    %v1070 = vpop.f32.mrb[0].mxu0
    %v1071 = vpop.f32.mrb[0].mxu0
    %v1072 = vpop.f32.mrb[0].mxu0
    %1073 = vdwg.mxu0
    %v1075 = vsel %vm378, %v840, 0
    %v1078 = vsel %vm846, %v375, 0
    %1080 = vmatprep.subr.bf16.mxu0 0
    %1081 = vmatpush1.bf16.msra.mxu0 %v1078
    %1082 = vmatprep.subr.bf16.mxu0 0
    %1083 = vmatpush1.bf16.msra.mxu0 0
    %1084 = vmatprep.subr.bf16.mxu0 0
    %1085 = vmatpush1.bf16.msra.mxu0 0
    %1086 = vmatprep.subr.bf16.mxu0 0
    %1087 = vmatpush1.bf16.msra.mxu0 0
    %1088 = vmatprep.subr.bf16.mxu0 0
    %1089 = vmatpush1.bf16.msra.mxu0 0
    %1090 = vmatprep.subr.bf16.mxu0 0
    %1091 = vmatpush1.bf16.msra.mxu0 0
    %1092 = vmatprep.subr.bf16.mxu0 0
    %1093 = vmatpush1.bf16.msra.mxu0 0
    %1094 = vmatprep.subr.bf16.mxu0 0
    %1095 = vmatpush1.bf16.msra.mxu0 0
    %1096 = vmatprep.subr.bf16.mxu0 0
    %1097 = vmatpush1.bf16.msra.mxu0 0
    %1098 = vmatprep.subr.bf16.mxu0 0
    %1099 = vmatpush1.bf16.msra.mxu0 0
    %1100 = vmatprep.subr.bf16.mxu0 0
    %1101 = vmatpush1.bf16.msra.mxu0 0
    %1102 = vmatprep.subr.bf16.mxu0 0
    %1103 = vmatpush1.bf16.msra.mxu0 0
    %1104 = vmatprep.subr.bf16.mxu0 0
    %1105 = vmatpush1.bf16.msra.mxu0 0
    %1106 = vmatprep.subr.bf16.mxu0 0
    %1107 = vmatpush1.bf16.msra.mxu0 0
    %1108 = vmatprep.subr.bf16.mxu0 0
    %1109 = vmatpush1.bf16.msra.mxu0 0
    %1110 = vmatprep.subr.bf16.mxu0 0
    %1111 = vmatpush1.bf16.msra.mxu0 0
    %1112 = vmatprep.mubr.bf16.mxu0 0
    %1113 = vmatmul.mubr.bf16.gmra.mrb[0].mxu0 %v1075
    %v1114 = vpop.f32.mrb[0].mxu0
    %v1115 = vadd.f32 0.0, %v1114
    %v1116 = vpop.f32.mrb[0].mxu0
    %v1117 = vpop.f32.mrb[0].mxu0
    %v1118 = vpop.f32.mrb[0].mxu0
    %1119 = vdwg.mxu0
    %v1121 = vsel %vm378, %v841, 0
    %v1124 = vsel %vm846, %v376, 0
    %1126 = vmatprep.subr.bf16.mxu0 0
    %1127 = vmatpush1.bf16.msra.mxu0 %v1124
    %1128 = vmatprep.subr.bf16.mxu0 0
    %1129 = vmatpush1.bf16.msra.mxu0 0
    %1130 = vmatprep.subr.bf16.mxu0 0
    %1131 = vmatpush1.bf16.msra.mxu0 0
    %1132 = vmatprep.subr.bf16.mxu0 0
    %1133 = vmatpush1.bf16.msra.mxu0 0
    %1134 = vmatprep.subr.bf16.mxu0 0
    %1135 = vmatpush1.bf16.msra.mxu0 0
    %1136 = vmatprep.subr.bf16.mxu0 0
    %1137 = vmatpush1.bf16.msra.mxu0 0
    %1138 = vmatprep.subr.bf16.mxu0 0
    %1139 = vmatpush1.bf16.msra.mxu0 0
    %1140 = vmatprep.subr.bf16.mxu0 0
    %1141 = vmatpush1.bf16.msra.mxu0 0
    %1142 = vmatprep.subr.bf16.mxu0 0
    %1143 = vmatpush1.bf16.msra.mxu0 0
    %1144 = vmatprep.subr.bf16.mxu0 0
    %1145 = vmatpush1.bf16.msra.mxu0 0
    %1146 = vmatprep.subr.bf16.mxu0 0
    %1147 = vmatpush1.bf16.msra.mxu0 0
    %1148 = vmatprep.subr.bf16.mxu0 0
    %1149 = vmatpush1.bf16.msra.mxu0 0
    %1150 = vmatprep.subr.bf16.mxu0 0
    %1151 = vmatpush1.bf16.msra.mxu0 0
    %1152 = vmatprep.subr.bf16.mxu0 0
    %1153 = vmatpush1.bf16.msra.mxu0 0
    %1154 = vmatprep.subr.bf16.mxu0 0
    %1155 = vmatpush1.bf16.msra.mxu0 0
    %1156 = vmatprep.subr.bf16.mxu0 0
    %1157 = vmatpush1.bf16.msra.mxu0 0
    %1158 = vmatprep.mubr.bf16.mxu0 0
    %1159 = vmatmul.mubr.bf16.gmra.mrb[0].mxu0 %v1121
    %v1160 = vpop.f32.mrb[0].mxu0
    %v1161 = vadd.f32 0.0, %v1160
    %v1162 = vpop.f32.mrb[0].mxu0
    %v1163 = vpop.f32.mrb[0].mxu0
    %v1164 = vpop.f32.mrb[0].mxu0
    %1165 = vdwg.mxu0
    %v1167 = vsel %vm378, %v842, 0
    %v1170 = vsel %vm846, %v377, 0
    %1172 = vmatprep.subr.bf16.mxu0 0
    %1173 = vmatpush1.bf16.msra.mxu0 %v1170
    %1174 = vmatprep.subr.bf16.mxu0 0
    %1175 = vmatpush1.bf16.msra.mxu0 0
    %1176 = vmatprep.subr.bf16.mxu0 0
    %1177 = vmatpush1.bf16.msra.mxu0 0
    %1178 = vmatprep.subr.bf16.mxu0 0
    %1179 = vmatpush1.bf16.msra.mxu0 0
    %1180 = vmatprep.subr.bf16.mxu0 0
    %1181 = vmatpush1.bf16.msra.mxu0 0
    %1182 = vmatprep.subr.bf16.mxu0 0
    %1183 = vmatpush1.bf16.msra.mxu0 0
    %1184 = vmatprep.subr.bf16.mxu0 0
    %1185 = vmatpush1.bf16.msra.mxu0 0
    %1186 = vmatprep.subr.bf16.mxu0 0
    %1187 = vmatpush1.bf16.msra.mxu0 0
    %1188 = vmatprep.subr.bf16.mxu0 0
    %1189 = vmatpush1.bf16.msra.mxu0 0
    %1190 = vmatprep.subr.bf16.mxu0 0
    %1191 = vmatpush1.bf16.msra.mxu0 0
    %1192 = vmatprep.subr.bf16.mxu0 0
    %1193 = vmatpush1.bf16.msra.mxu0 0
    %1194 = vmatprep.subr.bf16.mxu0 0
    %1195 = vmatpush1.bf16.msra.mxu0 0
    %1196 = vmatprep.subr.bf16.mxu0 0
    %1197 = vmatpush1.bf16.msra.mxu0 0
    %1198 = vmatprep.subr.bf16.mxu0 0
    %1199 = vmatpush1.bf16.msra.mxu0 0
    %1200 = vmatprep.subr.bf16.mxu0 0
    %1201 = vmatpush1.bf16.msra.mxu0 0
    %1202 = vmatprep.subr.bf16.mxu0 0
    %1203 = vmatpush1.bf16.msra.mxu0 0
    %1204 = vmatprep.mubr.bf16.mxu0 0
    %1205 = vmatmul.mubr.bf16.gmra.mrb[0].mxu0 %v1167
    %v1206 = vpop.f32.mrb[0].mxu0
    %v1207 = vadd.f32 0.0, %v1206
    %v1208 = vpop.f32.mrb[0].mxu0
    %v1209 = vpop.f32.mrb[0].mxu0
    %v1210 = vpop.f32.mrb[0].mxu0
    %1211 = vdwg.mxu0
    %1214 = vrot.lane.b32.xlu0 %v977, 8
    %v1215 = vpop.permute.xlu0 %1214
    %1216 = vrot.lane.b32.xlu0 %v1023, 8
    %v1217 = vpop.permute.xlu0 %1216
    %1222 = vrot.lane.b32.xlu0 %v1069, 16
    %v1223 = vpop.permute.xlu0 %1222
    %1224 = vrot.lane.b32.xlu0 %v1115, 16
    %v1225 = vpop.permute.xlu0 %1224
    %1230 = vrot.lane.b32.xlu0 %v1161, 24
    %v1231 = vpop.permute.xlu0 %1230
    %1232 = vrot.lane.b32.xlu0 %v1207, 24
    %v1233 = vpop.permute.xlu0 %1232
    %v1236 = vsel %vm378, %v885, %v1215
    %v1237 = vsel %vm378, %v931, %v1217
    %vm1238 = vcmask 130048
    %v1239 = vsel %vm1238, %v1236, %v1223
    %v1240 = vsel %vm1238, %v1237, %v1225
    %vm1241 = vcmask 195584
    %v1242 = vsel %vm1241, %v1239, %v1231
    %v1243 = vsel %vm1241, %v1240, %v1233
    %v1244 = vpack.c.bf16 %v1243, %v1242
    %v1245 = vld [vmem:[%s7] sm:$0xf]
    %v1246 = vld [vmem:[%s7 + $0x4] sm:$0xf]
    %v1247 = vld [vmem:[%s7 + $0x8] sm:$0xf]
    %v1248 = vld [vmem:[%s7 + $0xc] sm:$0xf]
    %v1249 = vld [vmem:[#allocation5] sm:$0x1]
    %v1251 = vlaneseq
    %v1252 = vshrl.u32 %v1251, 7
    %v1253 = vsub.s32 0, %v1252
    %v1254 = vrot.slane %v1249, %v1253
    %v1260 = vunpack.c.l.b16 %v1245
    %v1261 = vunpack.c.l.b16 %v1246
    %v1262 = vunpack.c.l.b16 %v1247
    %v1263 = vunpack.c.l.b16 %v1248
    %v1264 = vpack.c.b16 %v1261, %v1260
    %v1265 = vpack.c.b16 %v1263, %v1262
    %v1269 = vsel %vm119, %v1244, 0
    %1271 = vmatprep.subr.bf16.mxu0 0
    %1272 = vmatpush1.bf16.msra.mxu0 %v1264
    %1273 = vmatprep.subr.bf16.mxu0 0
    %1274 = vmatpush1.bf16.msra.mxu0 %v1265
    %1275 = vmatprep.subr.bf16.mxu0 0
    %1276 = vmatpush1.bf16.msra.mxu0 0
    %1277 = vmatprep.subr.bf16.mxu0 0
    %1278 = vmatpush1.bf16.msra.mxu0 0
    %1279 = vmatprep.subr.bf16.mxu0 0
    %1280 = vmatpush1.bf16.msra.mxu0 0
    %1281 = vmatprep.subr.bf16.mxu0 0
    %1282 = vmatpush1.bf16.msra.mxu0 0
    %1283 = vmatprep.subr.bf16.mxu0 0
    %1284 = vmatpush1.bf16.msra.mxu0 0
    %1285 = vmatprep.subr.bf16.mxu0 0
    %1286 = vmatpush1.bf16.msra.mxu0 0
    %1287 = vmatprep.subr.bf16.mxu0 0
    %1288 = vmatpush1.bf16.msra.mxu0 0
    %1289 = vmatprep.subr.bf16.mxu0 0
    %1290 = vmatpush1.bf16.msra.mxu0 0
    %1291 = vmatprep.subr.bf16.mxu0 0
    %1292 = vmatpush1.bf16.msra.mxu0 0
    %1293 = vmatprep.subr.bf16.mxu0 0
    %1294 = vmatpush1.bf16.msra.mxu0 0
    %1295 = vmatprep.subr.bf16.mxu0 0
    %1296 = vmatpush1.bf16.msra.mxu0 0
    %1297 = vmatprep.subr.bf16.mxu0 0
    %1298 = vmatpush1.bf16.msra.mxu0 0
    %1299 = vmatprep.subr.bf16.mxu0 0
    %1300 = vmatpush1.bf16.msra.mxu0 0
    %1301 = vmatprep.subr.bf16.mxu0 0
    %1302 = vmatpush1.bf16.msra.mxu0 0
    %1303 = vmatprep.mubr.bf16.mxu0 0
    %1304 = vmatmul.mubr.bf16.gmra.mrb[0].mxu0 %v1269
    %v1305 = vpop.f32.mrb[0].mxu0
    %v1306 = vadd.f32 %v1254, %v1305
    %v1307 = vpop.f32.mrb[0].mxu0
    %v1308 = vpop.f32.mrb[0].mxu0
    %v1309 = vadd.f32 %v1254, %v1308
    %v1310 = vpop.f32.mrb[0].mxu0
    %1311 = vdwg.mxu0
    %v1312 = vadd.f32 %v1306, %v93
    %v1313 = vadd.f32 %v1309, %v94
    %v1314 = vld [vmem:[#allocation7] sm:$0x1]
    %v1315 = vld [vmem:[%s10] sm:$0x1]
    %v1316 = vsel %vm119, %v1312, 0.0
    %1317 = vadd.xlane.f32.xlu0 %v1316
    %v1318 = vpop.xlane.xlu0 %1317
    %v1319 = vsel %vm119, %v1313, 0.0
    %1320 = vadd.xlane.f32.xlu0 %v1319
    %v1321 = vpop.xlane.xlu0 %1320
    %v1322 = vrcp.pop 32.0
    %v1323 = vmul.f32 %v1318, %v1322
    %v1324 = vmul.f32 %v1321, %v1322
    %v1325 = vsub.f32 %v1312, %v1323
    %v1326 = vsub.f32 %v1313, %v1324
    %v1327 = vmul.f32 %v1325, %v1325
    %v1328 = vmul.f32 %v1326, %v1326
    %v1329 = vsel %vm119, %v1327, 0.0
    %1330 = vadd.xlane.f32.xlu0 %v1329
    %v1331 = vpop.xlane.xlu0 %1330
    %v1332 = vsel %vm119, %v1328, 0.0
    %1333 = vadd.xlane.f32.xlu0 %v1332
    %v1334 = vpop.xlane.xlu0 %1333
    %v1335 = vmul.f32 %v1331, %v1322
    %v1336 = vmul.f32 %v1334, %v1322
    %v1337 = vadd.f32 %v1335, 1e-05
    %v1338 = vadd.f32 %v1336, 1e-05
    %v1339 = vrsqrt.pop %v1337
    %v1340 = vrsqrt.pop %v1338
    %v1341 = vmul.f32 %v1325, %v1339
    %v1342 = vmul.f32 %v1326, %v1340
    %v1344 = vlaneseq
    %v1345 = vshrl.u32 %v1344, 7
    %v1346 = vsub.s32 0, %v1345
    %v1347 = vrot.slane %v1314, %v1346
    %v1349 = vmul.f32 %v1341, %v1347
    %v1350 = vmul.f32 %v1342, %v1347
    %v1352 = vlaneseq
    %v1353 = vshrl.u32 %v1352, 7
    %v1354 = vsub.s32 0, %v1353
    %v1355 = vrot.slane %v1315, %v1354
    %v1357 = vadd.f32 %v1349, %v1355
    %v1358 = vadd.f32 %v1350, %v1355
    %v1359 = vpack.c.bf16 %v1358, %v1357
    %v1360 = vld [vmem:[%s11] sm:$0xf]
    %v1361 = vld [vmem:[%s11 + $0x4] sm:$0xf]
    %v1362 = vld [vmem:[%s11 + $0x8] sm:$0xf]
    %v1363 = vld [vmem:[%s11 + $0xc] sm:$0xf]
    %v1364 = vld [vmem:[%s12] sm:$0x1]
    %v1366 = vlaneseq
    %v1367 = vshrl.u32 %v1366, 7
    %v1368 = vsub.s32 0, %v1367
    %v1369 = vrot.slane %v1364, %v1368
    %v1375 = vunpack.c.l.b16 %v1360
    %v1376 = vunpack.c.l.b16 %v1361
    %v1377 = vunpack.c.l.b16 %v1362
    %v1378 = vunpack.c.l.b16 %v1363
    %v1379 = vpack.c.b16 %v1376, %v1375
    %v1380 = vpack.c.b16 %v1378, %v1377
    %v1384 = vsel %vm119, %v1359, 0
    %1386 = vmatprep.subr.bf16.mxu0 0
    %1387 = vmatpush1.bf16.msra.mxu0 %v1379
    %1388 = vmatprep.subr.bf16.mxu0 0
    %1389 = vmatpush1.bf16.msra.mxu0 %v1380
    %1390 = vmatprep.subr.bf16.mxu0 0
    %1391 = vmatpush1.bf16.msra.mxu0 0
    %1392 = vmatprep.subr.bf16.mxu0 0
    %1393 = vmatpush1.bf16.msra.mxu0 0
    %1394 = vmatprep.subr.bf16.mxu0 0
    %1395 = vmatpush1.bf16.msra.mxu0 0
    %1396 = vmatprep.subr.bf16.mxu0 0
    %1397 = vmatpush1.bf16.msra.mxu0 0
    %1398 = vmatprep.subr.bf16.mxu0 0
    %1399 = vmatpush1.bf16.msra.mxu0 0
    %1400 = vmatprep.subr.bf16.mxu0 0
    %1401 = vmatpush1.bf16.msra.mxu0 0
    %1402 = vmatprep.subr.bf16.mxu0 0
    %1403 = vmatpush1.bf16.msra.mxu0 0
    %1404 = vmatprep.subr.bf16.mxu0 0
    %1405 = vmatpush1.bf16.msra.mxu0 0
    %1406 = vmatprep.subr.bf16.mxu0 0
    %1407 = vmatpush1.bf16.msra.mxu0 0
    %1408 = vmatprep.subr.bf16.mxu0 0
    %1409 = vmatpush1.bf16.msra.mxu0 0
    %1410 = vmatprep.subr.bf16.mxu0 0
    %1411 = vmatpush1.bf16.msra.mxu0 0
    %1412 = vmatprep.subr.bf16.mxu0 0
    %1413 = vmatpush1.bf16.msra.mxu0 0
    %1414 = vmatprep.subr.bf16.mxu0 0
    %1415 = vmatpush1.bf16.msra.mxu0 0
    %1416 = vmatprep.subr.bf16.mxu0 0
    %1417 = vmatpush1.bf16.msra.mxu0 0
    %1418 = vmatprep.mubr.bf16.mxu0 0
    %1419 = vmatmul.mubr.bf16.gmra.mrb[0].mxu0 %v1384
    %v1420 = vpop.f32.mrb[0].mxu0
    %v1421 = vadd.f32 %v1369, %v1420
    %v1422 = vpop.f32.mrb[0].mxu0
    %v1423 = vpop.f32.mrb[0].mxu0
    %v1424 = vadd.f32 %v1369, %v1423
    %v1425 = vpop.f32.mrb[0].mxu0
    %1426 = vdwg.mxu0
    %v1427 = vmax.f32 %v1421, 0.0
    %v1428 = vmax.f32 %v1424, 0.0
    %v1429 = vpack.c.bf16 %v1428, %v1427
    %v1430 = vld [vmem:[%s13] sm:$0xf]
    %v1431 = vld [vmem:[%s13 + $0x4] sm:$0xf]
    %v1432 = vld [vmem:[%s13 + $0x8] sm:$0xf]
    %v1433 = vld [vmem:[%s13 + $0xc] sm:$0xf]
    %v1434 = vld [vmem:[%s13 + $0x10] sm:$0xf]
    %v1435 = vld [vmem:[%s13 + $0x14] sm:$0xf]
    %v1436 = vld [vmem:[%s13 + $0x18] sm:$0xf]
    %v1437 = vld [vmem:[%s13 + $0x1c] sm:$0xf]
    %v1438 = vld [vmem:[%s13 + $0x20] sm:$0xf]
    %v1439 = vld [vmem:[%s13 + $0x24] sm:$0xf]
    %v1440 = vld [vmem:[%s13 + $0x28] sm:$0xf]
    %v1441 = vld [vmem:[%s13 + $0x2c] sm:$0xf]
    %v1442 = vld [vmem:[%s13 + $0x30] sm:$0xf]
    %v1443 = vld [vmem:[%s13 + $0x34] sm:$0xf]
    %v1444 = vld [vmem:[%s13 + $0x38] sm:$0xf]
    %v1445 = vld [vmem:[%s13 + $0x3c] sm:$0xf]
    %v1446 = vld [vmem:[%s14] sm:$0x1]
    %v1448 = vlaneseq
    %v1449 = vshrl.u32 %v1448, 7
    %v1450 = vsub.s32 0, %v1449
    %v1451 = vrot.slane %v1446, %v1450
    %v1469 = vunpack.c.l.b16 %v1430
    %v1470 = vunpack.c.l.b16 %v1431
    %v1471 = vunpack.c.l.b16 %v1432
    %v1472 = vunpack.c.l.b16 %v1433
    %v1473 = vunpack.c.l.b16 %v1434
    %v1474 = vunpack.c.l.b16 %v1435
    %v1475 = vunpack.c.l.b16 %v1436
    %v1476 = vunpack.c.l.b16 %v1437
    %v1477 = vunpack.c.l.b16 %v1438
    %v1478 = vunpack.c.l.b16 %v1439
    %v1479 = vunpack.c.l.b16 %v1440
    %v1480 = vunpack.c.l.b16 %v1441
    %v1481 = vunpack.c.l.b16 %v1442
    %v1482 = vunpack.c.l.b16 %v1443
    %v1483 = vunpack.c.l.b16 %v1444
    %v1484 = vunpack.c.l.b16 %v1445
    %v1485 = vpack.c.b16 %v1470, %v1469
    %v1486 = vpack.c.b16 %v1472, %v1471
    %v1487 = vpack.c.b16 %v1474, %v1473
    %v1488 = vpack.c.b16 %v1476, %v1475
    %v1489 = vpack.c.b16 %v1478, %v1477
    %v1490 = vpack.c.b16 %v1480, %v1479
    %v1491 = vpack.c.b16 %v1482, %v1481
    %v1492 = vpack.c.b16 %v1484, %v1483
    %1501 = vmatprep.subr.bf16.mxu0 0
    %1502 = vmatpush1.bf16.msra.mxu0 %v1485
    %1503 = vmatprep.subr.bf16.mxu0 0
    %1504 = vmatpush1.bf16.msra.mxu0 %v1486
    %1505 = vmatprep.subr.bf16.mxu0 0
    %1506 = vmatpush1.bf16.msra.mxu0 %v1487
    %1507 = vmatprep.subr.bf16.mxu0 0
    %1508 = vmatpush1.bf16.msra.mxu0 %v1488
    %1509 = vmatprep.subr.bf16.mxu0 0
    %1510 = vmatpush1.bf16.msra.mxu0 %v1489
    %1511 = vmatprep.subr.bf16.mxu0 0
    %1512 = vmatpush1.bf16.msra.mxu0 %v1490
    %1513 = vmatprep.subr.bf16.mxu0 0
    %1514 = vmatpush1.bf16.msra.mxu0 %v1491
    %1515 = vmatprep.subr.bf16.mxu0 0
    %1516 = vmatpush1.bf16.msra.mxu0 %v1492
    %1517 = vmatprep.subr.bf16.mxu0 0
    %1518 = vmatpush1.bf16.msra.mxu0 0
    %1519 = vmatprep.subr.bf16.mxu0 0
    %1520 = vmatpush1.bf16.msra.mxu0 0
    %1521 = vmatprep.subr.bf16.mxu0 0
    %1522 = vmatpush1.bf16.msra.mxu0 0
    %1523 = vmatprep.subr.bf16.mxu0 0
    %1524 = vmatpush1.bf16.msra.mxu0 0
    %1525 = vmatprep.subr.bf16.mxu0 0
    %1526 = vmatpush1.bf16.msra.mxu0 0
    %1527 = vmatprep.subr.bf16.mxu0 0
    %1528 = vmatpush1.bf16.msra.mxu0 0
    %1529 = vmatprep.subr.bf16.mxu0 0
    %1530 = vmatpush1.bf16.msra.mxu0 0
    %1531 = vmatprep.subr.bf16.mxu0 0
    %1532 = vmatpush1.bf16.msra.mxu0 0
    %1533 = vmatprep.mubr.bf16.mxu0 0
    %1534 = vmatmul.mubr.bf16.gmra.mrb[0].mxu0 %v1429
    %v1535 = vpop.f32.mrb[0].mxu0
    %v1536 = vadd.f32 %v1451, %v1535
    %v1537 = vpop.f32.mrb[0].mxu0
    %v1538 = vpop.f32.mrb[0].mxu0
    %v1539 = vadd.f32 %v1451, %v1538
    %v1540 = vpop.f32.mrb[0].mxu0
    %1541 = vdwg.mxu0
    %v1542 = vadd.f32 %v1536, %v1357
    %v1543 = vadd.f32 %v1539, %v1358
    %v1544 = vld [vmem:[%s15] sm:$0x1]
    %v1545 = vld [vmem:[%s16] sm:$0x1]
    %v1546 = vsel %vm119, %v1542, 0.0
    %1547 = vadd.xlane.f32.xlu0 %v1546
    %v1548 = vpop.xlane.xlu0 %1547
    %v1549 = vsel %vm119, %v1543, 0.0
    %1550 = vadd.xlane.f32.xlu0 %v1549
    %v1551 = vpop.xlane.xlu0 %1550
    %v1552 = vmul.f32 %v1548, %v1322
    %v1553 = vmul.f32 %v1551, %v1322
    %v1554 = vsub.f32 %v1542, %v1552
    %v1555 = vsub.f32 %v1543, %v1553
    %v1556 = vmul.f32 %v1554, %v1554
    %v1557 = vmul.f32 %v1555, %v1555
    %v1558 = vsel %vm119, %v1556, 0.0
    %1559 = vadd.xlane.f32.xlu0 %v1558
    %v1560 = vpop.xlane.xlu0 %1559
    %v1561 = vsel %vm119, %v1557, 0.0
    %1562 = vadd.xlane.f32.xlu0 %v1561
    %v1563 = vpop.xlane.xlu0 %1562
    %v1564 = vmul.f32 %v1560, %v1322
    %v1565 = vmul.f32 %v1563, %v1322
    %v1566 = vadd.f32 %v1564, 1e-05
    %v1567 = vadd.f32 %v1565, 1e-05
    %v1568 = vrsqrt.pop %v1566
    %v1569 = vrsqrt.pop %v1567
    %v1570 = vmul.f32 %v1554, %v1568
    %v1571 = vmul.f32 %v1555, %v1569
    %v1573 = vlaneseq
    %v1574 = vshrl.u32 %v1573, 7
    %v1575 = vsub.s32 0, %v1574
    %v1576 = vrot.slane %v1544, %v1575
    %v1578 = vmul.f32 %v1570, %v1576
    %v1579 = vmul.f32 %v1571, %v1576
    %v1581 = vlaneseq
    %v1582 = vshrl.u32 %v1581, 7
    %v1583 = vsub.s32 0, %v1582
    %v1584 = vrot.slane %v1545, %v1583
    %v1586 = vadd.f32 %v1578, %v1584
    %v1587 = vadd.f32 %v1579, %v1584
    %1588 = vst.msk [vmem:[#allocation8] sm:$0xff] %vm119, %v1586
    %1589 = vst.msk [vmem:[#allocation8 + $0x8] sm:$0xff] %vm119, %v1587
    // Predicated region
    $region82: #{tpu_custom_call.1} parent=1 // pred_check
      _
    $region83: #{tpu_custom_call.1} parent=1 // pred_check_branch
      %1591 = sbr.rel (0) target = $region85
    $region84: #{tpu_custom_call.1} parent=1 // pred_region
      %s1593 = ssub.s32 256, 256
      %1594 = vsyncadd [#allocation4], %s1593
      %s1595 = sshll.u32 [#allocation8], 4
      %s1596 = int_to_ptr.vmem [resolvable:$true] %s1595
      %1601 = dma.vmem_to_hbm [thread:$0]  %s1596, 256, %s17, [#allocation4], 128, 128, 8
    $region85: #{tpu_custom_call.1} parent=1 // pred_fallthru
      _
    // Predicated region
    $region86: #{tpu_custom_call.1} parent=1 // pred_check
      _
    $region87: #{tpu_custom_call.1} parent=1 // pred_check_branch
      %1603 = sbr.rel (0) target = $region89
    $region88: #{tpu_custom_call.1} parent=1 // pred_region
      %1604 = dma.done [#allocation4], 256
    $region89: #{tpu_custom_call.1} parent=1 // pred_fallthru
      _
    %1605 = vsyncpa [#allocation3], 1
    %1606 = vsyncpa [#allocation6], 1
    %1607 = vsyncpa [#allocation4], 1

</llo_original>
